<compile_context>
chip_gen: v5e
topology: v5e:2x2
jax: 0.10.0
libtpu: 0.0.40
codegen_flags: <defaults>
</compile_context>

<pallas_src>
import math

import jax
import jax.numpy as jnp
from jax.experimental import pallas as pl
from jax.experimental.pallas import tpu as pltpu


def _round_up(x, m):
    return (x + m - 1) // m * m


def _adv_net_kernel(x_ref, w1_ref, b1_ref, w2_ref, b2_ref, w3_ref, b3_ref,
                    o_ref):
    """One batch tile of the MLP; weights stay resident across grid steps."""
    # In-kernel bf16 downcast of x: VPU work that hides under the MXU-bound
    # layers and avoids a separate wrapper-side HBM cast pass.
    x = x_ref[...].astype(jnp.bfloat16)                        # (TB, IN) bf16
    # ad_layer1 + relu1 + fused bf16 downcast (dropout1 identity at inference).
    h = jnp.dot(x, w1_ref[...], preferred_element_type=jnp.float32)
    h = jnp.maximum(h + b1_ref[...], 0.0).astype(jnp.bfloat16)  # (TB, H) bf16
    # ad_layer2 + relu2 (dropout2 identity at inference).
    h = jnp.dot(h, w2_ref[...], preferred_element_type=jnp.float32)
    h = jnp.maximum(h + b2_ref[...], 0.0)                       # (TB, H) f32
    # ad_layer3 + sigmoid: output width is 1, so instead of a 1-column MXU
    # matmul use a VPU multiply + lane (XLU) reduction; sigmoid runs on EUP.
    w3_row = w3_ref[...].astype(jnp.float32)                    # (1, H)
    y = jnp.sum(h * w3_row, axis=-1, keepdims=True) + b3_ref[0, 0]
    o_ref[...] = jax.nn.sigmoid(y).astype(o_ref.dtype)          # (TB, 1)


def _vmem_budget_bytes():
    """Physical VMEM minus ~8 MiB headroom for compiler-internal scratch.

    v7x: 64 MiB/TC -> ~56 MiB budget; v5e/v6e: 128 MiB -> ~120 MiB budget."""
    try:
        cap = int(pltpu.get_tpu_info().vmem_capacity_bytes)
    except Exception:
        cap = 64 << 20          # conservative (v7x-sized) default
    return cap - (8 << 20)


def _pick_batch_tile(padded, tile_batch, row_bytes, resident_bytes, budget):
    """Largest multiple-of-128 divisor of `padded` that fits tile_batch and the
    VMEM budget; prefer >= 2 grid steps so v7x's second TensorCore gets work."""
    limit = max(128, min(int(tile_batch), padded))
    avail = budget - resident_bytes
    if row_bytes > 0 and avail > 0:
        limit = max(128, min(limit, (avail // row_bytes) // 128 * 128))
    m = padded // 128
    cands = [128 * d for d in range(1, m + 1) if m % d == 0 and 128 * d <= limit]
    tb = max(cands) if cands else 128
    if padded // tb == 1 and padded >= 256:
        halved = [c for c in cands if c <= padded // 2]
        if halved:
            tb = max(halved)
    return tb


def _build_call(*, tb, padded, in_feature, hidden, vmem_limit, cost,
                single_buffer_weights):
    if single_buffer_weights:
        def resident(shape):
            # Constant index_map -> fetched once; single buffer halves VMEM use.
            return pl.BlockSpec(shape, lambda i: (0, 0),
                                pipeline_mode=pl.Buffered(1))
    else:
        def resident(shape):
            return pl.BlockSpec(shape, lambda i: (0, 0))

    return pl.pallas_call(
        _adv_net_kernel,
        out_shape=jax.ShapeDtypeStruct((padded, 1), jnp.float32),
        grid=(padded // tb,),
        in_specs=[
            pl.BlockSpec((tb, in_feature), lambda i: (i, 0)),     # x tile (pipelined, f32)
            resident((in_feature, hidden)),                       # w1 (bf16)
            resident((1, hidden)),                                # b1 (f32)
            resident((hidden, hidden)),                           # w2 (bf16)
            resident((1, hidden)),                                # b2 (f32)
            resident((1, hidden)),                                # w3 row (bf16)
            pl.BlockSpec(memory_space=pltpu.MemorySpace.SMEM),    # b3 scalar (f32)
        ],
        out_specs=pl.BlockSpec((tb, 1), lambda i: (i, 0)),
        compiler_params=pltpu.CompilerParams(
            dimension_semantics=("parallel",),                    # 2 TCs on v7x
            vmem_limit_bytes=vmem_limit,
        ),
        cost_estimate=cost,
    )


def adversarial_network_forward(x, prepared_params, *, tile_batch=1024):
    """prepared_params = prepare_params((w1, b1, w2, b2, w3, b3))."""
    w1, b1, w2, b2, w3, b3 = prepared_params
    batch, in_feature = x.shape
    hidden = w1.shape[1]
    itemsize = x.dtype.itemsize

    # Pad the batch only to the 128-row sublane granule (not to the tile size)
    # to minimize wasted rows; padded rows compute finite garbage sliced off
    # below.
    padded = _round_up(batch, 128)
    if padded != batch:
        x = jnp.pad(x, ((0, padded - batch), (0, 0)))

    budget = _vmem_budget_bytes()
    # Conservative (double-buffered) resident-operand footprint: bf16 weights
    # + f32 biases.  Used for both tile sizing and the compiler VMEM ceiling.
    resident_bytes = 2 * ((in_feature * hidden + hidden * hidden + hidden) * 2
                          + 2 * hidden * 4)
    # Per-batch-row VMEM: double-buffered x tile + activation temporaries
    # (f32 h, bf16 copy, product temp) + double-buffered (row, 1) out block
    # padded to full (8, 128) tiles.
    row_bytes = 2 * in_feature * itemsize + 3 * hidden * 4 + 2 * 512

    tb = _pick_batch_tile(padded, tile_batch, row_bytes, resident_bytes, budget)
    vmem_limit = int(max(16 << 20,
                         min(resident_bytes + tb * row_bytes + (4 << 20),
                             budget)))

    cost = pl.CostEstimate(
        flops=2 * padded * (in_feature * hidden + hidden * hidden + hidden),
        transcendentals=2 * padded,          # sigmoid ~= exp + reciprocal / row
        bytes_accessed=(padded * in_feature * itemsize                  # x (f32)
                        + (in_feature * hidden + hidden * hidden + hidden) * 2
                        + (2 * hidden + 1) * 4                          # biases
                        + padded * 4),                                  # output
    )

    args = (x, w1, b1, w2, b2, w3, b3)
    try:
        out = _build_call(tb=tb, padded=padded, in_feature=in_feature,
                          hidden=hidden, vmem_limit=vmem_limit, cost=cost,
                          single_buffer_weights=True)(*args)
    except Exception:
        # TODO(synk): pipeline_mode=pl.Buffered(1) rejected by this jax/Mosaic
        # build; fall back to default double-buffered resident weights.
        out = _build_call(tb=tb, padded=padded, in_feature=in_feature,
                          hidden=hidden, vmem_limit=vmem_limit, cost=cost,
                          single_buffer_weights=False)(*args)
    return out[:batch]


def init_params(key, in_feature, hidden_size):
    """Matches the PyTorch module's init: xavier_normal_ weights, default
    nn.Linear bias init uniform(-1/sqrt(fan_in), 1/sqrt(fan_in)).
    Weights are stored transposed to (in_dim, out_dim), f32."""
    keys = jax.random.split(key, 6)

    def xavier_normal(k, fan_in, fan_out):
        std = math.sqrt(2.0 / (fan_in + fan_out))
        return (std * jax.random.normal(k, (fan_in, fan_out))).astype(jnp.float32)

    def bias_uniform(k, fan_in, fan_out):
        bound = 1.0 / math.sqrt(fan_in)
        return jax.random.uniform(
            k, (1, fan_out), minval=-bound, maxval=bound).astype(jnp.float32)

    w1 = xavier_normal(keys[0], in_feature, hidden_size)
    b1 = bias_uniform(keys[1], in_feature, hidden_size)
    w2 = xavier_normal(keys[2], hidden_size, hidden_size)
    b2 = bias_uniform(keys[3], hidden_size, hidden_size)
    w3 = xavier_normal(keys[4], hidden_size, 1)
    b3 = bias_uniform(keys[5], hidden_size, 1)
    return (w1, b1, w2, b2, w3, b3)


def prepare_params(params):
    """One-time conversion to the kernel layout/dtypes (do this once at
    parameter creation, not per call): bf16 weights, f32 biases."""
    w1, b1, w2, b2, w3, b3 = params
    hidden = w1.shape[1]
    return (w1.astype(jnp.bfloat16),
            b1.reshape(1, hidden).astype(jnp.float32),
            w2.astype(jnp.bfloat16),
            b2.reshape(1, hidden).astype(jnp.float32),
            w3.reshape(1, hidden).astype(jnp.bfloat16),
            b3.reshape(1, 1).astype(jnp.float32))


def reference_forward(x, prepared_params):
    """Pure-JAX reference mirroring the kernel's bf16-input / f32-accum math.
    (bf16 MXU inputs deviate slightly from the fp32 PyTorch forward; fine for
    a domain discriminator.)"""
    w1, b1, w2, b2, w3, b3 = prepared_params
    f32 = jnp.float32
    h = jnp.maximum(
        jnp.dot(x.astype(jnp.bfloat16), w1, preferred_element_type=f32) + b1, 0.0)
    h = jnp.maximum(
        jnp.dot(h.astype(jnp.bfloat16), w2, preferred_element_type=f32) + b2, 0.0)
    y = jnp.sum(h * w3.astype(f32), axis=-1, keepdims=True) + b3
    return jax.nn.sigmoid(y)


if __name__ == "__main__":
    base_key = jax.random.PRNGKey(0)

    def check(idx, batch, in_feature, hidden):
        key = jax.random.fold_in(base_key, idx)
        kx, kp = jax.random.split(key)
        x = jax.random.normal(kx, (batch, in_feature), dtype=jnp.float32)
        params = prepare_params(init_params(kp, in_feature, hidden))
        y = jax.block_until_ready(adversarial_network_forward(x, params))
        y_ref = reference_forward(x, params)
        assert y.shape == (batch, 1), y.shape
        err = float(jnp.max(jnp.abs(y - y_ref)))
        assert err < 2e-3, (batch, in_feature, hidden, err)

    # Small config consistent with the module (single 128-row tile, padded batch).
    check(0, batch=2, in_feature=32, hidden=32)
    # Multi-step grid + tight 128-row padding path (600 -> 640 rows, 5 tiles).
    check(1, batch=600, in_feature=64, hidden=128)
    # Lane-multiple feature sizes, two 1024-row tiles (v7x dual-TC friendly).
    check(2, batch=2048, in_feature=256, hidden=256)

    print("KERNEL_OK")
</pallas_src>

<mosaic_0001>
module attributes {stable_mosaic.version = 11 : i64} {
  func.func @_adv_net_kernel(%arg0: i32, %arg1: memref<128x32xf32, #tpu.memory_space<vmem>>, %arg2: memref<32x32xbf16, #tpu.memory_space<vmem>>, %arg3: memref<1x32xf32, #tpu.memory_space<vmem>>, %arg4: memref<32x32xbf16, #tpu.memory_space<vmem>>, %arg5: memref<1x32xf32, #tpu.memory_space<vmem>>, %arg6: memref<1x32xbf16, #tpu.memory_space<vmem>>, %arg7: memref<1x1xf32, #tpu.memory_space<smem>>, %arg8: memref<128x1xf32, #tpu.memory_space<vmem>>) attributes {dimension_semantics = [#tpu.dimension_semantics<parallel>], iteration_bounds = array<i64: 1>, scalar_prefetch = 0 : i64, scratch_operands = 0 : i64, tpu.core_type = #tpu.core_type<tc>, window_params = [{transform_indices = @transform_0, window_bounds = array<i64: 128, 32>}, {pipeline_mode = #tpu.pipeline_mode<synchronous>, transform_indices = @transform_1, window_bounds = array<i64: 32, 32>}, {pipeline_mode = #tpu.pipeline_mode<synchronous>, transform_indices = @transform_2, window_bounds = array<i64: 1, 32>}, {pipeline_mode = #tpu.pipeline_mode<synchronous>, transform_indices = @transform_3, window_bounds = array<i64: 32, 32>}, {pipeline_mode = #tpu.pipeline_mode<synchronous>, transform_indices = @transform_4, window_bounds = array<i64: 1, 32>}, {pipeline_mode = #tpu.pipeline_mode<synchronous>, transform_indices = @transform_5, window_bounds = array<i64: 1, 32>}, {transform_indices = @transform_6, window_bounds = array<i64: 1, 1>}, {transform_indices = @transform_7, window_bounds = array<i64: 128, 1>}]} {
    %c0 = arith.constant 0 : index
    %c0_0 = arith.constant 0 : index
    %0 = vector.load %arg1[%c0, %c0_0] : memref<128x32xf32, #tpu.memory_space<vmem>>, vector<128x32xf32>
    %1 = arith.truncf %0 : vector<128x32xf32> to vector<128x32xbf16>
    %c0_1 = arith.constant 0 : index
    %c0_2 = arith.constant 0 : index
    %2 = vector.load %arg2[%c0_1, %c0_2] : memref<32x32xbf16, #tpu.memory_space<vmem>>, vector<32x32xbf16>
    %cst = arith.constant dense<0.000000e+00> : vector<128x32xf32>
    %3 = tpu.matmul %1, %2, %cst {dimension_numbers = #tpu.dot_dimension_numbers<[1], [0], [0], [1], [0, 0, 1, 1], [], []>} : vector<128x32xbf16>, vector<32x32xbf16>, vector<128x32xf32> -> vector<128x32xf32>
    %c0_3 = arith.constant 0 : index
    %c0_4 = arith.constant 0 : index
    %4 = vector.load %arg3[%c0_3, %c0_4] : memref<1x32xf32, #tpu.memory_space<vmem>>, vector<1x32xf32>
    %5 = vector.broadcast %4 : vector<1x32xf32> to vector<128x32xf32>
    %6 = arith.addf %3, %5 : vector<128x32xf32>
    %cst_5 = arith.constant 0.000000e+00 : f32
    %7 = vector.broadcast %cst_5 : f32 to vector<128x32xf32>
    %8 = arith.maximumf %6, %7 : vector<128x32xf32>
    %9 = arith.truncf %8 : vector<128x32xf32> to vector<128x32xbf16>
    %c0_6 = arith.constant 0 : index
    %c0_7 = arith.constant 0 : index
    %10 = vector.load %arg4[%c0_6, %c0_7] : memref<32x32xbf16, #tpu.memory_space<vmem>>, vector<32x32xbf16>
    %cst_8 = arith.constant dense<0.000000e+00> : vector<128x32xf32>
    %11 = tpu.matmul %9, %10, %cst_8 {dimension_numbers = #tpu.dot_dimension_numbers<[1], [0], [0], [1], [0, 0, 1, 1], [], []>} : vector<128x32xbf16>, vector<32x32xbf16>, vector<128x32xf32> -> vector<128x32xf32>
    %c0_9 = arith.constant 0 : index
    %c0_10 = arith.constant 0 : index
    %12 = vector.load %arg5[%c0_9, %c0_10] : memref<1x32xf32, #tpu.memory_space<vmem>>, vector<1x32xf32>
    %13 = vector.broadcast %12 : vector<1x32xf32> to vector<128x32xf32>
    %14 = arith.addf %11, %13 : vector<128x32xf32>
    %cst_11 = arith.constant 0.000000e+00 : f32
    %15 = vector.broadcast %cst_11 : f32 to vector<128x32xf32>
    %16 = arith.maximumf %14, %15 : vector<128x32xf32>
    %c0_12 = arith.constant 0 : index
    %c0_13 = arith.constant 0 : index
    %17 = vector.load %arg6[%c0_12, %c0_13] : memref<1x32xbf16, #tpu.memory_space<vmem>>, vector<1x32xbf16>
    %18 = arith.extf %17 : vector<1x32xbf16> to vector<1x32xf32>
    %19 = vector.broadcast %18 : vector<1x32xf32> to vector<128x32xf32>
    %20 = arith.mulf %16, %19 : vector<128x32xf32>
    %cst_14 = arith.constant dense<0.000000e+00> : vector<128xf32>
    %21 = vector.multi_reduction <add>, %20, %cst_14 [1] : vector<128x32xf32> to vector<128xf32>
    %22 = vector.shape_cast %21 : vector<128xf32> to vector<128x1xf32>
    %c0_15 = arith.constant 0 : index
    %c0_16 = arith.constant 0 : index
    %23 = memref.load %arg7[%c0_15, %c0_16] : memref<1x1xf32, #tpu.memory_space<smem>>
    %24 = vector.broadcast %23 : f32 to vector<128x1xf32>
    %25 = arith.addf %22, %24 : vector<128x1xf32>
    %26 = arith.negf %25 : vector<128x1xf32>
    %27 = math.exp %26 : vector<128x1xf32>
    %cst_17 = arith.constant 1.000000e+00 : f32
    %28 = vector.broadcast %cst_17 : f32 to vector<128x1xf32>
    %29 = arith.addf %28, %27 : vector<128x1xf32>
    %30 = arith.divf %28, %29 : vector<128x1xf32>
    %c0_18 = arith.constant 0 : index
    %c0_19 = arith.constant 0 : index
    %31 = vector.load %arg8[%c0_18, %c0_19] : memref<128x1xf32, #tpu.memory_space<vmem>>, vector<128x1xf32>
    tpu.vector_store %arg8[%c0_18, %c0_19], %30 {strides = array<i32>} : memref<128x1xf32, #tpu.memory_space<vmem>>, vector<128x1xf32>,
    return
  }
  func.func @transform_0(%arg0: i32) -> (i32, i32) {
    %c0_i32 = arith.constant 0 : i32
    %c0_i32_0 = arith.constant 0 : i32
    return %arg0, %c0_i32 : i32, i32
  }
  func.func @transform_1(%arg0: i32) -> (i32, i32) {
    %c0_i32 = arith.constant 0 : i32
    %c0_i32_0 = arith.constant 0 : i32
    %c0_i32_1 = arith.constant 0 : i32
    return %c0_i32, %c0_i32_0 : i32, i32
  }
  func.func @transform_2(%arg0: i32) -> (i32, i32) {
    %c0_i32 = arith.constant 0 : i32
    %c0_i32_0 = arith.constant 0 : i32
    %c0_i32_1 = arith.constant 0 : i32
    return %c0_i32, %c0_i32_0 : i32, i32
  }
  func.func @transform_3(%arg0: i32) -> (i32, i32) {
    %c0_i32 = arith.constant 0 : i32
    %c0_i32_0 = arith.constant 0 : i32
    %c0_i32_1 = arith.constant 0 : i32
    return %c0_i32, %c0_i32_0 : i32, i32
  }
  func.func @transform_4(%arg0: i32) -> (i32, i32) {
    %c0_i32 = arith.constant 0 : i32
    %c0_i32_0 = arith.constant 0 : i32
    %c0_i32_1 = arith.constant 0 : i32
    return %c0_i32, %c0_i32_0 : i32, i32
  }
  func.func @transform_5(%arg0: i32) -> (i32, i32) {
    %c0_i32 = arith.constant 0 : i32
    %c0_i32_0 = arith.constant 0 : i32
    %c0_i32_1 = arith.constant 0 : i32
    return %c0_i32, %c0_i32_0 : i32, i32
  }
  func.func @transform_6(%arg0: i32) -> (i32, i32) {
    %c0_i32 = arith.constant 0 : i32
    %c0_i32_0 = arith.constant 0 : i32
    %c0_i32_1 = arith.constant 0 : i32
    return %c0_i32, %c0_i32_0 : i32, i32
  }
  func.func @transform_7(%arg0: i32) -> (i32, i32) {
    %c0_i32 = arith.constant 0 : i32
    %c0_i32_0 = arith.constant 0 : i32
    return %arg0, %c0_i32 : i32, i32
  }
}

module attributes {stable_mosaic.version = 11 : i64} {
  func.func @_adv_net_kernel(%arg0: i32, %arg1: memref<128x32xf32, #tpu.memory_space<vmem>>, %arg2: memref<32x32xbf16, #tpu.memory_space<vmem>>, %arg3: memref<1x32xf32, #tpu.memory_space<vmem>>, %arg4: memref<32x32xbf16, #tpu.memory_space<vmem>>, %arg5: memref<1x32xf32, #tpu.memory_space<vmem>>, %arg6: memref<1x32xbf16, #tpu.memory_space<vmem>>, %arg7: memref<1x1xf32, #tpu.memory_space<smem>>, %arg8: memref<128x1xf32, #tpu.memory_space<vmem>>) attributes {dimension_semantics = [#tpu.dimension_semantics<parallel>], iteration_bounds = array<i64: 1>, scalar_prefetch = 0 : i64, scratch_operands = 0 : i64, tpu.core_type = #tpu.core_type<tc>, window_params = [{transform_indices = @transform_0, window_bounds = array<i64: 128, 32>}, {pipeline_mode = #tpu.pipeline_mode<synchronous>, transform_indices = @transform_1, window_bounds = array<i64: 32, 32>}, {pipeline_mode = #tpu.pipeline_mode<synchronous>, transform_indices = @transform_2, window_bounds = array<i64: 1, 32>}, {pipeline_mode = #tpu.pipeline_mode<synchronous>, transform_indices = @transform_3, window_bounds = array<i64: 32, 32>}, {pipeline_mode = #tpu.pipeline_mode<synchronous>, transform_indices = @transform_4, window_bounds = array<i64: 1, 32>}, {pipeline_mode = #tpu.pipeline_mode<synchronous>, transform_indices = @transform_5, window_bounds = array<i64: 1, 32>}, {transform_indices = @transform_6, window_bounds = array<i64: 1, 1>}, {transform_indices = @transform_7, window_bounds = array<i64: 128, 1>}]} {
    %c0 = arith.constant 0 : index
    %c0_0 = arith.constant 0 : index
    %0 = vector.load %arg1[%c0, %c0_0] : memref<128x32xf32, #tpu.memory_space<vmem>>, vector<128x32xf32>
    %1 = arith.truncf %0 : vector<128x32xf32> to vector<128x32xbf16>
    %c0_1 = arith.constant 0 : index
    %c0_2 = arith.constant 0 : index
    %2 = vector.load %arg2[%c0_1, %c0_2] : memref<32x32xbf16, #tpu.memory_space<vmem>>, vector<32x32xbf16>
    %cst = arith.constant dense<0.000000e+00> : vector<128x32xf32>
    %3 = tpu.matmul %1, %2, %cst {dimension_numbers = #tpu.dot_dimension_numbers<[1], [0], [0], [1], [0, 0, 1, 1], [], []>} : vector<128x32xbf16>, vector<32x32xbf16>, vector<128x32xf32> -> vector<128x32xf32>
    %c0_3 = arith.constant 0 : index
    %c0_4 = arith.constant 0 : index
    %4 = vector.load %arg3[%c0_3, %c0_4] : memref<1x32xf32, #tpu.memory_space<vmem>>, vector<1x32xf32>
    %5 = vector.broadcast %4 : vector<1x32xf32> to vector<128x32xf32>
    %6 = arith.addf %3, %5 : vector<128x32xf32>
    %cst_5 = arith.constant 0.000000e+00 : f32
    %7 = vector.broadcast %cst_5 : f32 to vector<128x32xf32>
    %8 = arith.maximumf %6, %7 : vector<128x32xf32>
    %9 = arith.truncf %8 : vector<128x32xf32> to vector<128x32xbf16>
    %c0_6 = arith.constant 0 : index
    %c0_7 = arith.constant 0 : index
    %10 = vector.load %arg4[%c0_6, %c0_7] : memref<32x32xbf16, #tpu.memory_space<vmem>>, vector<32x32xbf16>
    %cst_8 = arith.constant dense<0.000000e+00> : vector<128x32xf32>
    %11 = tpu.matmul %9, %10, %cst_8 {dimension_numbers = #tpu.dot_dimension_numbers<[1], [0], [0], [1], [0, 0, 1, 1], [], []>} : vector<128x32xbf16>, vector<32x32xbf16>, vector<128x32xf32> -> vector<128x32xf32>
    %c0_9 = arith.constant 0 : index
    %c0_10 = arith.constant 0 : index
    %12 = vector.load %arg5[%c0_9, %c0_10] : memref<1x32xf32, #tpu.memory_space<vmem>>, vector<1x32xf32>
    %13 = vector.broadcast %12 : vector<1x32xf32> to vector<128x32xf32>
    %14 = arith.addf %11, %13 : vector<128x32xf32>
    %cst_11 = arith.constant 0.000000e+00 : f32
    %15 = vector.broadcast %cst_11 : f32 to vector<128x32xf32>
    %16 = arith.maximumf %14, %15 : vector<128x32xf32>
    %c0_12 = arith.constant 0 : index
    %c0_13 = arith.constant 0 : index
    %17 = vector.load %arg6[%c0_12, %c0_13] : memref<1x32xbf16, #tpu.memory_space<vmem>>, vector<1x32xbf16>
    %18 = arith.extf %17 : vector<1x32xbf16> to vector<1x32xf32>
    %19 = vector.broadcast %18 : vector<1x32xf32> to vector<128x32xf32>
    %20 = arith.mulf %16, %19 : vector<128x32xf32>
    %cst_14 = arith.constant dense<0.000000e+00> : vector<128xf32>
    %21 = vector.multi_reduction <add>, %20, %cst_14 [1] : vector<128x32xf32> to vector<128xf32>
    %22 = vector.shape_cast %21 : vector<128xf32> to vector<128x1xf32>
    %c0_15 = arith.constant 0 : index
    %c0_16 = arith.constant 0 : index
    %23 = memref.load %arg7[%c0_15, %c0_16] : memref<1x1xf32, #tpu.memory_space<smem>>
    %24 = vector.broadcast %23 : f32 to vector<128x1xf32>
    %25 = arith.addf %22, %24 : vector<128x1xf32>
    %26 = arith.negf %25 : vector<128x1xf32>
    %27 = math.exp %26 : vector<128x1xf32>
    %cst_17 = arith.constant 1.000000e+00 : f32
    %28 = vector.broadcast %cst_17 : f32 to vector<128x1xf32>
    %29 = arith.addf %28, %27 : vector<128x1xf32>
    %30 = arith.divf %28, %29 : vector<128x1xf32>
    %c0_18 = arith.constant 0 : index
    %c0_19 = arith.constant 0 : index
    %31 = vector.load %arg8[%c0_18, %c0_19] : memref<128x1xf32, #tpu.memory_space<vmem>>, vector<128x1xf32>
    tpu.vector_store %arg8[%c0_18, %c0_19], %30 {strides = array<i32>} : memref<128x1xf32, #tpu.memory_space<vmem>>, vector<128x1xf32>,
    return
  }
  func.func @transform_0(%arg0: i32) -> (i32, i32) {
    %c0_i32 = arith.constant 0 : i32
    %c0_i32_0 = arith.constant 0 : i32
    return %arg0, %c0_i32 : i32, i32
  }
  func.func @transform_1(%arg0: i32) -> (i32, i32) {
    %c0_i32 = arith.constant 0 : i32
    %c0_i32_0 = arith.constant 0 : i32
    %c0_i32_1 = arith.constant 0 : i32
    return %c0_i32, %c0_i32_0 : i32, i32
  }
  func.func @transform_2(%arg0: i32) -> (i32, i32) {
    %c0_i32 = arith.constant 0 : i32
    %c0_i32_0 = arith.constant 0 : i32
    %c0_i32_1 = arith.constant 0 : i32
    return %c0_i32, %c0_i32_0 : i32, i32
  }
  func.func @transform_3(%arg0: i32) -> (i32, i32) {
    %c0_i32 = arith.constant 0 : i32
    %c0_i32_0 = arith.constant 0 : i32
    %c0_i32_1 = arith.constant 0 : i32
    return %c0_i32, %c0_i32_0 : i32, i32
  }
  func.func @transform_4(%arg0: i32) -> (i32, i32) {
    %c0_i32 = arith.constant 0 : i32
    %c0_i32_0 = arith.constant 0 : i32
    %c0_i32_1 = arith.constant 0 : i32
    return %c0_i32, %c0_i32_0 : i32, i32
  }
  func.func @transform_5(%arg0: i32) -> (i32, i32) {
    %c0_i32 = arith.constant 0 : i32
    %c0_i32_0 = arith.constant 0 : i32
    %c0_i32_1 = arith.constant 0 : i32
    return %c0_i32, %c0_i32_0 : i32, i32
  }
  func.func @transform_6(%arg0: i32) -> (i32, i32) {
    %c0_i32 = arith.constant 0 : i32
    %c0_i32_0 = arith.constant 0 : i32
    %c0_i32_1 = arith.constant 0 : i32
    return %c0_i32, %c0_i32_0 : i32, i32
  }
  func.func @transform_7(%arg0: i32) -> (i32, i32) {
    %c0_i32 = arith.constant 0 : i32
    %c0_i32_0 = arith.constant 0 : i32
    return %arg0, %c0_i32 : i32, i32
  }
}

</mosaic_0001>

<llo_original>
// kernel: tpu_custom_call.1
$region0: #{tpu_custom_call.1}
  #allocation0 [shape = 'u32[]', space=smem, size = 0x4, offset = 0x4, fixed_abs, tag = 'smem constant byte address 0x4 - core index']
  #allocation1 [shape = 'u32[72,128]{1,0:T(1,128)}', space=vmem, size = 0x9000, scoped, tag = 'internal scratch']
  #allocation2 [shape = 'f32[1,1]{1,0:T(1,128)S(6)}', space=smem, size = 0x200, scoped, tag = 'scoped memory for tpu_custom_call.1']
  %s0 = inlined_call_operand.vmem [shape: f32[128,32], index: 0, kind: input, shape index: {}]
  %s1 = inlined_call_operand.vmem [shape: bf16[32,32], index: 1, kind: input, shape index: {}]
  %s2 = inlined_call_operand.vmem [shape: f32[1,32], index: 2, kind: input, shape index: {}]
  %s3 = inlined_call_operand.vmem [shape: bf16[32,32], index: 3, kind: input, shape index: {}]
  %s4 = inlined_call_operand.vmem [shape: f32[1,32], index: 4, kind: input, shape index: {}]
  %s5 = inlined_call_operand.vmem [shape: bf16[1,32], index: 5, kind: input, shape index: {}]
  %s6 = inlined_call_operand.<no memory space> [shape: f32[1,1], index: 6, kind: input, shape index: {}]
  %s7 = inlined_call_operand.vmem [shape: f32[128,1], index: 7, kind: output, shape index: {}]
  %s8 = sld [smem:[#allocation0]]
  $region38: #{tpu_custom_call.1} parent=0
    _
  %s10 = ssub.s32 1, %s8
  %s11 = scalar_select 0, %s10, %s8
  %12 = sst [smem:[#allocation2]] %s6
  // Predicated region
  $region2: #{tpu_custom_call.1} parent=0 // pred_check
    _
  $region3: #{tpu_custom_call.1} parent=0 // pred_check_branch
    %14 = sbr.rel (0) target = $region5
  $region4: #{tpu_custom_call.1} parent=0 // pred_region
    _
  $region5: #{tpu_custom_call.1} parent=0 // pred_fallthru
    _
  // Predicated region
  $region6: #{tpu_custom_call.1} parent=0 // pred_check
    _
  $region7: #{tpu_custom_call.1} parent=0 // pred_check_branch
    %16 = sbr.rel (0) target = $region9
  $region8: #{tpu_custom_call.1} parent=0 // pred_region
    _
  $region9: #{tpu_custom_call.1} parent=0 // pred_fallthru
    _
  // Predicated region
  $region10: #{tpu_custom_call.1} parent=0 // pred_check
    _
  $region11: #{tpu_custom_call.1} parent=0 // pred_check_branch
    %18 = sbr.rel (0) target = $region13
  $region12: #{tpu_custom_call.1} parent=0 // pred_region
    _
  $region13: #{tpu_custom_call.1} parent=0 // pred_fallthru
    _
  // Predicated region
  $region14: #{tpu_custom_call.1} parent=0 // pred_check
    _
  $region15: #{tpu_custom_call.1} parent=0 // pred_check_branch
    %20 = sbr.rel (0) target = $region17
  $region16: #{tpu_custom_call.1} parent=0 // pred_region
    _
  $region17: #{tpu_custom_call.1} parent=0 // pred_fallthru
    _
  // Predicated region
  $region18: #{tpu_custom_call.1} parent=0 // pred_check
    _
  $region19: #{tpu_custom_call.1} parent=0 // pred_check_branch
    %22 = sbr.rel (0) target = $region21
  $region20: #{tpu_custom_call.1} parent=0 // pred_region
    _
  $region21: #{tpu_custom_call.1} parent=0 // pred_fallthru
    _
  // Predicated region
  $region22: #{tpu_custom_call.1} parent=0 // pred_check
    _
  $region23: #{tpu_custom_call.1} parent=0 // pred_check_branch
    %24 = sbr.rel (0) target = $region25
  $region24: #{tpu_custom_call.1} parent=0 // pred_region
    _
  $region25: #{tpu_custom_call.1} parent=0 // pred_fallthru
    _
  // Predicated region
  $region26: #{tpu_custom_call.1} parent=0 // pred_check
    _
  $region27: #{tpu_custom_call.1} parent=0 // pred_check_branch
    %26 = sbr.rel (0) target = $region29
  $region28: #{tpu_custom_call.1} parent=0 // pred_region
    _
  $region29: #{tpu_custom_call.1} parent=0 // pred_fallthru
    _
  %v28 = vld [vmem:[%s0] sm:$0xff]
  %v29 = vld [vmem:[%s0 + $0x8] sm:$0xff]
  %v30 = vld [vmem:[%s0 + $0x10] sm:$0xff]
  %v31 = vld [vmem:[%s0 + $0x18] sm:$0xff]
  %v32 = vld [vmem:[%s0 + $0x20] sm:$0xff]
  %v33 = vld [vmem:[%s0 + $0x28] sm:$0xff]
  %v34 = vld [vmem:[%s0 + $0x30] sm:$0xff]
  %v35 = vld [vmem:[%s0 + $0x38] sm:$0xff]
  %v36 = vld [vmem:[%s0 + $0x40] sm:$0xff]
  %v37 = vld [vmem:[%s0 + $0x48] sm:$0xff]
  %v38 = vld [vmem:[%s0 + $0x50] sm:$0xff]
  %v39 = vld [vmem:[%s0 + $0x58] sm:$0xff]
  %v40 = vld [vmem:[%s0 + $0x60] sm:$0xff]
  %v41 = vld [vmem:[%s0 + $0x68] sm:$0xff]
  %v42 = vld [vmem:[%s0 + $0x70] sm:$0xff]
  %v43 = vld [vmem:[%s0 + $0x78] sm:$0xff]
  %v44 = vpack.c.bf16 %v29, %v28
  %v45 = vpack.c.bf16 %v31, %v30
  %v46 = vpack.c.bf16 %v33, %v32
  %v47 = vpack.c.bf16 %v35, %v34
  %v48 = vpack.c.bf16 %v37, %v36
  %v49 = vpack.c.bf16 %v39, %v38
  %v50 = vpack.c.bf16 %v41, %v40
  %v51 = vpack.c.bf16 %v43, %v42
  %v52 = vld [vmem:[%s1] sm:$0xf]
  %v53 = vld [vmem:[%s1 + $0x4] sm:$0xf]
  %v54 = vld [vmem:[%s1 + $0x8] sm:$0xf]
  %v55 = vld [vmem:[%s1 + $0xc] sm:$0xf]
  %v56 = vld [vmem:[%s2] sm:$0x1]
  %v58 = vperm.slane %v56, 0
  %v64 = vunpack.c.l.b16 %v52
  %v65 = vunpack.c.l.b16 %v53
  %v66 = vunpack.c.l.b16 %v54
  %v67 = vunpack.c.l.b16 %v55
  %v68 = vpack.c.b16 %v65, %v64
  %v69 = vpack.c.b16 %v67, %v66
  %vm72 = vcmask 261120
  %v74 = vsel %vm72, %v44, 0
  %v77 = vsel %vm72, %v45, 0
  %v80 = vsel %vm72, %v46, 0
  %v83 = vsel %vm72, %v47, 0
  %v86 = vsel %vm72, %v48, 0
  %v89 = vsel %vm72, %v49, 0
  %v92 = vsel %vm72, %v50, 0
  %v95 = vsel %vm72, %v51, 0
  %97 = vmatpush.bf16.msra.mxu0 0
  %98 = vmatpush.bf16.msra.mxu0 0
  %99 = vmatpush.bf16.msra.mxu0 0
  %100 = vmatpush.bf16.msra.mxu0 0
  %101 = vmatpush.bf16.msra.mxu0 0
  %102 = vmatpush.bf16.msra.mxu0 0
  %103 = vmatpush.bf16.msra.mxu0 %v69
  %104 = vmatpush.bf16.msra.mxu0 %v68
  %105 = vmatmul.bf16.gmra.mxu0 %v74
  %v106 = vpop.f32.mrf.mxu0
  %v107 = vadd.f32 %v58, %v106
  %v108 = vpop.f32.mrf.mxu0
  %v109 = vadd.f32 %v58, %v108
  %110 = vmatmul.bf16.gmra.mxu0 %v77
  %v111 = vpop.f32.mrf.mxu0
  %v112 = vadd.f32 %v58, %v111
  %v113 = vpop.f32.mrf.mxu0
  %v114 = vadd.f32 %v58, %v113
  %115 = vmatmul.bf16.gmra.mxu0 %v80
  %v116 = vpop.f32.mrf.mxu0
  %v117 = vadd.f32 %v58, %v116
  %v118 = vpop.f32.mrf.mxu0
  %v119 = vadd.f32 %v58, %v118
  %120 = vmatmul.bf16.gmra.mxu0 %v83
  %v121 = vpop.f32.mrf.mxu0
  %v122 = vadd.f32 %v58, %v121
  %v123 = vpop.f32.mrf.mxu0
  %v124 = vadd.f32 %v58, %v123
  %125 = vmatmul.bf16.gmra.mxu0 %v86
  %v126 = vpop.f32.mrf.mxu0
  %v127 = vadd.f32 %v58, %v126
  %v128 = vpop.f32.mrf.mxu0
  %v129 = vadd.f32 %v58, %v128
  %130 = vmatmul.bf16.gmra.mxu0 %v89
  %v131 = vpop.f32.mrf.mxu0
  %v132 = vadd.f32 %v58, %v131
  %v133 = vpop.f32.mrf.mxu0
  %v134 = vadd.f32 %v58, %v133
  %135 = vmatmul.bf16.gmra.mxu0 %v92
  %v136 = vpop.f32.mrf.mxu0
  %v137 = vadd.f32 %v58, %v136
  %v138 = vpop.f32.mrf.mxu0
  %v139 = vadd.f32 %v58, %v138
  %140 = vmatmul.bf16.gmra.mxu0 %v95
  %v141 = vpop.f32.mrf.mxu0
  %v142 = vadd.f32 %v58, %v141
  %v143 = vpop.f32.mrf.mxu0
  %v144 = vadd.f32 %v58, %v143
  %145 = vdwg.mxu0
  %v146 = vmax.f32 %v107, 0.0
  %v147 = vmax.f32 %v109, 0.0
  %v148 = vmax.f32 %v112, 0.0
  %v149 = vmax.f32 %v114, 0.0
  %v150 = vmax.f32 %v117, 0.0
  %v151 = vmax.f32 %v119, 0.0
  %v152 = vmax.f32 %v122, 0.0
  %v153 = vmax.f32 %v124, 0.0
  %v154 = vmax.f32 %v127, 0.0
  %v155 = vmax.f32 %v129, 0.0
  %v156 = vmax.f32 %v132, 0.0
  %v157 = vmax.f32 %v134, 0.0
  %v158 = vmax.f32 %v137, 0.0
  %v159 = vmax.f32 %v139, 0.0
  %v160 = vmax.f32 %v142, 0.0
  %v161 = vmax.f32 %v144, 0.0
  %v162 = vpack.c.bf16 %v147, %v146
  %v163 = vpack.c.bf16 %v149, %v148
  %v164 = vpack.c.bf16 %v151, %v150
  %v165 = vpack.c.bf16 %v153, %v152
  %v166 = vpack.c.bf16 %v155, %v154
  %v167 = vpack.c.bf16 %v157, %v156
  %v168 = vpack.c.bf16 %v159, %v158
  %v169 = vpack.c.bf16 %v161, %v160
  %v170 = vld [vmem:[%s3] sm:$0xf]
  %v171 = vld [vmem:[%s3 + $0x4] sm:$0xf]
  %v172 = vld [vmem:[%s3 + $0x8] sm:$0xf]
  %v173 = vld [vmem:[%s3 + $0xc] sm:$0xf]
  %v174 = vld [vmem:[%s4] sm:$0x1]
  %v176 = vperm.slane %v174, 0
  %v182 = vunpack.c.l.b16 %v170
  %v183 = vunpack.c.l.b16 %v171
  %v184 = vunpack.c.l.b16 %v172
  %v185 = vunpack.c.l.b16 %v173
  %v186 = vpack.c.b16 %v183, %v182
  %v187 = vpack.c.b16 %v185, %v184
  %v191 = vsel %vm72, %v162, 0
  %v194 = vsel %vm72, %v163, 0
  %v197 = vsel %vm72, %v164, 0
  %v200 = vsel %vm72, %v165, 0
  %v203 = vsel %vm72, %v166, 0
  %v206 = vsel %vm72, %v167, 0
  %v209 = vsel %vm72, %v168, 0
  %v212 = vsel %vm72, %v169, 0
  %214 = vmatpush.bf16.msra.mxu0 0
  %215 = vmatpush.bf16.msra.mxu0 0
  %216 = vmatpush.bf16.msra.mxu0 0
  %217 = vmatpush.bf16.msra.mxu0 0
  %218 = vmatpush.bf16.msra.mxu0 0
  %219 = vmatpush.bf16.msra.mxu0 0
  %220 = vmatpush.bf16.msra.mxu0 %v187
  %221 = vmatpush.bf16.msra.mxu0 %v186
  %222 = vmatmul.bf16.gmra.mxu0 %v191
  %v223 = vpop.f32.mrf.mxu0
  %v224 = vadd.f32 %v176, %v223
  %v225 = vpop.f32.mrf.mxu0
  %v226 = vadd.f32 %v176, %v225
  %227 = vmatmul.bf16.gmra.mxu0 %v194
  %v228 = vpop.f32.mrf.mxu0
  %v229 = vadd.f32 %v176, %v228
  %v230 = vpop.f32.mrf.mxu0
  %v231 = vadd.f32 %v176, %v230
  %232 = vmatmul.bf16.gmra.mxu0 %v197
  %v233 = vpop.f32.mrf.mxu0
  %v234 = vadd.f32 %v176, %v233
  %v235 = vpop.f32.mrf.mxu0
  %v236 = vadd.f32 %v176, %v235
  %237 = vmatmul.bf16.gmra.mxu0 %v200
  %v238 = vpop.f32.mrf.mxu0
  %v239 = vadd.f32 %v176, %v238
  %v240 = vpop.f32.mrf.mxu0
  %v241 = vadd.f32 %v176, %v240
  %242 = vmatmul.bf16.gmra.mxu0 %v203
  %v243 = vpop.f32.mrf.mxu0
  %v244 = vadd.f32 %v176, %v243
  %v245 = vpop.f32.mrf.mxu0
  %v246 = vadd.f32 %v176, %v245
  %247 = vmatmul.bf16.gmra.mxu0 %v206
  %v248 = vpop.f32.mrf.mxu0
  %v249 = vadd.f32 %v176, %v248
  %v250 = vpop.f32.mrf.mxu0
  %v251 = vadd.f32 %v176, %v250
  %252 = vmatmul.bf16.gmra.mxu0 %v209
  %v253 = vpop.f32.mrf.mxu0
  %v254 = vadd.f32 %v176, %v253
  %v255 = vpop.f32.mrf.mxu0
  %v256 = vadd.f32 %v176, %v255
  %257 = vmatmul.bf16.gmra.mxu0 %v212
  %v258 = vpop.f32.mrf.mxu0
  %v259 = vadd.f32 %v176, %v258
  %v260 = vpop.f32.mrf.mxu0
  %v261 = vadd.f32 %v176, %v260
  %262 = vdwg.mxu0
  %v263 = vmax.f32 %v224, 0.0
  %v264 = vmax.f32 %v226, 0.0
  %v265 = vmax.f32 %v229, 0.0
  %v266 = vmax.f32 %v231, 0.0
  %v267 = vmax.f32 %v234, 0.0
  %v268 = vmax.f32 %v236, 0.0
  %v269 = vmax.f32 %v239, 0.0
  %v270 = vmax.f32 %v241, 0.0
  %v271 = vmax.f32 %v244, 0.0
  %v272 = vmax.f32 %v246, 0.0
  %v273 = vmax.f32 %v249, 0.0
  %v274 = vmax.f32 %v251, 0.0
  %v275 = vmax.f32 %v254, 0.0
  %v276 = vmax.f32 %v256, 0.0
  %v277 = vmax.f32 %v259, 0.0
  %v278 = vmax.f32 %v261, 0.0
  %v279 = vld [vmem:[%s5] sm:$0x1]
  %v280 = vunpack.c.l.bf16 %v279
  %v281 = vperm.slane %v280, 0
  %v282 = vmul.f32 %v263, %v281
  %v283 = vmul.f32 %v264, %v281
  %v284 = vmul.f32 %v265, %v281
  %v285 = vmul.f32 %v266, %v281
  %v286 = vmul.f32 %v267, %v281
  %v287 = vmul.f32 %v268, %v281
  %v288 = vmul.f32 %v269, %v281
  %v289 = vmul.f32 %v270, %v281
  %v290 = vmul.f32 %v271, %v281
  %v291 = vmul.f32 %v272, %v281
  %v292 = vmul.f32 %v273, %v281
  %v293 = vmul.f32 %v274, %v281
  %v294 = vmul.f32 %v275, %v281
  %v295 = vmul.f32 %v276, %v281
  %v296 = vmul.f32 %v277, %v281
  %v297 = vmul.f32 %v278, %v281
  %v298 = vsel %vm72, %v282, 0.0
  %299 = vadd.xlane.f32.xlu0 %v298
  %v300 = vpop.xlane.xlu0 %299
  %v301 = vsel %vm72, %v283, 0.0
  %302 = vadd.xlane.f32.xlu0 %v301
  %v303 = vpop.xlane.xlu0 %302
  %v304 = vsel %vm72, %v284, 0.0
  %305 = vadd.xlane.f32.xlu0 %v304
  %v306 = vpop.xlane.xlu0 %305
  %v307 = vsel %vm72, %v285, 0.0
  %308 = vadd.xlane.f32.xlu0 %v307
  %v309 = vpop.xlane.xlu0 %308
  %v310 = vsel %vm72, %v286, 0.0
  %311 = vadd.xlane.f32.xlu0 %v310
  %v312 = vpop.xlane.xlu0 %311
  %v313 = vsel %vm72, %v287, 0.0
  %314 = vadd.xlane.f32.xlu0 %v313
  %v315 = vpop.xlane.xlu0 %314
  %v316 = vsel %vm72, %v288, 0.0
  %317 = vadd.xlane.f32.xlu0 %v316
  %v318 = vpop.xlane.xlu0 %317
  %v319 = vsel %vm72, %v289, 0.0
  %320 = vadd.xlane.f32.xlu0 %v319
  %v321 = vpop.xlane.xlu0 %320
  %v322 = vsel %vm72, %v290, 0.0
  %323 = vadd.xlane.f32.xlu0 %v322
  %v324 = vpop.xlane.xlu0 %323
  %v325 = vsel %vm72, %v291, 0.0
  %326 = vadd.xlane.f32.xlu0 %v325
  %v327 = vpop.xlane.xlu0 %326
  %v328 = vsel %vm72, %v292, 0.0
  %329 = vadd.xlane.f32.xlu0 %v328
  %v330 = vpop.xlane.xlu0 %329
  %v331 = vsel %vm72, %v293, 0.0
  %332 = vadd.xlane.f32.xlu0 %v331
  %v333 = vpop.xlane.xlu0 %332
  %v334 = vsel %vm72, %v294, 0.0
  %335 = vadd.xlane.f32.xlu0 %v334
  %v336 = vpop.xlane.xlu0 %335
  %v337 = vsel %vm72, %v295, 0.0
  %338 = vadd.xlane.f32.xlu0 %v337
  %v339 = vpop.xlane.xlu0 %338
  %v340 = vsel %vm72, %v296, 0.0
  %341 = vadd.xlane.f32.xlu0 %v340
  %v342 = vpop.xlane.xlu0 %341
  %v343 = vsel %vm72, %v297, 0.0
  %344 = vadd.xlane.f32.xlu0 %v343
  %v345 = vpop.xlane.xlu0 %344
  %s346 = sld [smem:[#allocation2]]
  %v347 = vstv %s346
  %v348 = vadd.f32 %v300, %v347
  %v349 = vadd.f32 %v303, %v347
  %v350 = vadd.f32 %v306, %v347
  %v351 = vadd.f32 %v309, %v347
  %v352 = vadd.f32 %v312, %v347
  %v353 = vadd.f32 %v315, %v347
  %v354 = vadd.f32 %v318, %v347
  %v355 = vadd.f32 %v321, %v347
  %v356 = vadd.f32 %v324, %v347
  %v357 = vadd.f32 %v327, %v347
  %v358 = vadd.f32 %v330, %v347
  %v359 = vadd.f32 %v333, %v347
  %v360 = vadd.f32 %v336, %v347
  %v361 = vadd.f32 %v339, %v347
  %v362 = vadd.f32 %v342, %v347
  %v363 = vadd.f32 %v345, %v347
  %v364 = vxor.u32 %v348, 2147483648
  %v365 = vxor.u32 %v349, 2147483648
  %v366 = vxor.u32 %v350, 2147483648
  %v367 = vxor.u32 %v351, 2147483648
  %v368 = vxor.u32 %v352, 2147483648
  %v369 = vxor.u32 %v353, 2147483648
  %v370 = vxor.u32 %v354, 2147483648
  %v371 = vxor.u32 %v355, 2147483648
  %v372 = vxor.u32 %v356, 2147483648
  %v373 = vxor.u32 %v357, 2147483648
  %v374 = vxor.u32 %v358, 2147483648
  %v375 = vxor.u32 %v359, 2147483648
  %v376 = vxor.u32 %v360, 2147483648
  %v377 = vxor.u32 %v361, 2147483648
  %v378 = vxor.u32 %v362, 2147483648
  %v379 = vxor.u32 %v363, 2147483648
  %v380 = vmul.f32 %v364, 1.442695
  %v381 = vpow.pop %v380
  %v382 = vmul.f32 %v365, 1.442695
  %v383 = vpow.pop %v382
  %v384 = vmul.f32 %v366, 1.442695
  %v385 = vpow.pop %v384
  %v386 = vmul.f32 %v367, 1.442695
  %v387 = vpow.pop %v386
  %v388 = vmul.f32 %v368, 1.442695
  %v389 = vpow.pop %v388
  %v390 = vmul.f32 %v369, 1.442695
  %v391 = vpow.pop %v390
  %v392 = vmul.f32 %v370, 1.442695
  %v393 = vpow.pop %v392
  %v394 = vmul.f32 %v371, 1.442695
  %v395 = vpow.pop %v394
  %v396 = vmul.f32 %v372, 1.442695
  %v397 = vpow.pop %v396
  %v398 = vmul.f32 %v373, 1.442695
  %v399 = vpow.pop %v398
  %v400 = vmul.f32 %v374, 1.442695
  %v401 = vpow.pop %v400
  %v402 = vmul.f32 %v375, 1.442695
  %v403 = vpow.pop %v402
  %v404 = vmul.f32 %v376, 1.442695
  %v405 = vpow.pop %v404
  %v406 = vmul.f32 %v377, 1.442695
  %v407 = vpow.pop %v406
  %v408 = vmul.f32 %v378, 1.442695
  %v409 = vpow.pop %v408
  %v410 = vmul.f32 %v379, 1.442695
  %v411 = vpow.pop %v410
  %v412 = vadd.f32 %v381, 1.0
  %v413 = vadd.f32 %v383, 1.0
  %v414 = vadd.f32 %v385, 1.0
  %v415 = vadd.f32 %v387, 1.0
  %v416 = vadd.f32 %v389, 1.0
  %v417 = vadd.f32 %v391, 1.0
  %v418 = vadd.f32 %v393, 1.0
  %v419 = vadd.f32 %v395, 1.0
  %v420 = vadd.f32 %v397, 1.0
  %v421 = vadd.f32 %v399, 1.0
  %v422 = vadd.f32 %v401, 1.0
  %v423 = vadd.f32 %v403, 1.0
  %v424 = vadd.f32 %v405, 1.0
  %v425 = vadd.f32 %v407, 1.0
  %v426 = vadd.f32 %v409, 1.0
  %v427 = vadd.f32 %v411, 1.0
  %v428 = vrcp.pop %v412
  %v429 = vmul.f32 %v412, %v428
  %v430 = vsub.f32 1.0, %v429
  %v431 = vmul.f32 %v428, %v430
  %v432 = vadd.f32 %v428, %v431
  %vm433 = vweird.f32 %v412
  %vm434 = vweird.f32 %v428
  %vm435 = vmor %vm433, %vm434
  %v436 = vsel %vm435, %v428, %v432
  %v437 = vand.u32 2147483647, %v412
  %vm438 = vcmp.eq.f32.partialorder %v437, 8.507059e+37
  %v439 = vand.u32 %v412, 2147483648
  %v440 = vor.u32 1.1754944e-38, %v439
  %v441 = vsel %vm438, %v440, %v436
  %v442 = vmul.f32 1.0, %v441
  %v443 = vrcp.pop %v413
  %v444 = vmul.f32 %v413, %v443
  %v445 = vsub.f32 1.0, %v444
  %v446 = vmul.f32 %v443, %v445
  %v447 = vadd.f32 %v443, %v446
  %vm448 = vweird.f32 %v413
  %vm449 = vweird.f32 %v443
  %vm450 = vmor %vm448, %vm449
  %v451 = vsel %vm450, %v443, %v447
  %v452 = vand.u32 2147483647, %v413
  %vm453 = vcmp.eq.f32.partialorder %v452, 8.507059e+37
  %v454 = vand.u32 %v413, 2147483648
  %v455 = vor.u32 1.1754944e-38, %v454
  %v456 = vsel %vm453, %v455, %v451
  %v457 = vmul.f32 1.0, %v456
  %v458 = vrcp.pop %v414
  %v459 = vmul.f32 %v414, %v458
  %v460 = vsub.f32 1.0, %v459
  %v461 = vmul.f32 %v458, %v460
  %v462 = vadd.f32 %v458, %v461
  %vm463 = vweird.f32 %v414
  %vm464 = vweird.f32 %v458
  %vm465 = vmor %vm463, %vm464
  %v466 = vsel %vm465, %v458, %v462
  %v467 = vand.u32 2147483647, %v414
  %vm468 = vcmp.eq.f32.partialorder %v467, 8.507059e+37
  %v469 = vand.u32 %v414, 2147483648
  %v470 = vor.u32 1.1754944e-38, %v469
  %v471 = vsel %vm468, %v470, %v466
  %v472 = vmul.f32 1.0, %v471
  %v473 = vrcp.pop %v415
  %v474 = vmul.f32 %v415, %v473
  %v475 = vsub.f32 1.0, %v474
  %v476 = vmul.f32 %v473, %v475
  %v477 = vadd.f32 %v473, %v476
  %vm478 = vweird.f32 %v415
  %vm479 = vweird.f32 %v473
  %vm480 = vmor %vm478, %vm479
  %v481 = vsel %vm480, %v473, %v477
  %v482 = vand.u32 2147483647, %v415
  %vm483 = vcmp.eq.f32.partialorder %v482, 8.507059e+37
  %v484 = vand.u32 %v415, 2147483648
  %v485 = vor.u32 1.1754944e-38, %v484
  %v486 = vsel %vm483, %v485, %v481
  %v487 = vmul.f32 1.0, %v486
  %v488 = vrcp.pop %v416
  %v489 = vmul.f32 %v416, %v488
  %v490 = vsub.f32 1.0, %v489
  %v491 = vmul.f32 %v488, %v490
  %v492 = vadd.f32 %v488, %v491
  %vm493 = vweird.f32 %v416
  %vm494 = vweird.f32 %v488
  %vm495 = vmor %vm493, %vm494
  %v496 = vsel %vm495, %v488, %v492
  %v497 = vand.u32 2147483647, %v416
  %vm498 = vcmp.eq.f32.partialorder %v497, 8.507059e+37
  %v499 = vand.u32 %v416, 2147483648
  %v500 = vor.u32 1.1754944e-38, %v499
  %v501 = vsel %vm498, %v500, %v496
  %v502 = vmul.f32 1.0, %v501
  %v503 = vrcp.pop %v417
  %v504 = vmul.f32 %v417, %v503
  %v505 = vsub.f32 1.0, %v504
  %v506 = vmul.f32 %v503, %v505
  %v507 = vadd.f32 %v503, %v506
  %vm508 = vweird.f32 %v417
  %vm509 = vweird.f32 %v503
  %vm510 = vmor %vm508, %vm509
  %v511 = vsel %vm510, %v503, %v507
  %v512 = vand.u32 2147483647, %v417
  %vm513 = vcmp.eq.f32.partialorder %v512, 8.507059e+37
  %v514 = vand.u32 %v417, 2147483648
  %v515 = vor.u32 1.1754944e-38, %v514
  %v516 = vsel %vm513, %v515, %v511
  %v517 = vmul.f32 1.0, %v516
  %v518 = vrcp.pop %v418
  %v519 = vmul.f32 %v418, %v518
  %v520 = vsub.f32 1.0, %v519
  %v521 = vmul.f32 %v518, %v520
  %v522 = vadd.f32 %v518, %v521
  %vm523 = vweird.f32 %v418
  %vm524 = vweird.f32 %v518
  %vm525 = vmor %vm523, %vm524
  %v526 = vsel %vm525, %v518, %v522
  %v527 = vand.u32 2147483647, %v418
  %vm528 = vcmp.eq.f32.partialorder %v527, 8.507059e+37
  %v529 = vand.u32 %v418, 2147483648
  %v530 = vor.u32 1.1754944e-38, %v529
  %v531 = vsel %vm528, %v530, %v526
  %v532 = vmul.f32 1.0, %v531
  %v533 = vrcp.pop %v419
  %v534 = vmul.f32 %v419, %v533
  %v535 = vsub.f32 1.0, %v534
  %v536 = vmul.f32 %v533, %v535
  %v537 = vadd.f32 %v533, %v536
  %vm538 = vweird.f32 %v419
  %vm539 = vweird.f32 %v533
  %vm540 = vmor %vm538, %vm539
  %v541 = vsel %vm540, %v533, %v537
  %v542 = vand.u32 2147483647, %v419
  %vm543 = vcmp.eq.f32.partialorder %v542, 8.507059e+37
  %v544 = vand.u32 %v419, 2147483648
  %v545 = vor.u32 1.1754944e-38, %v544
  %v546 = vsel %vm543, %v545, %v541
  %v547 = vmul.f32 1.0, %v546
  %v548 = vrcp.pop %v420
  %v549 = vmul.f32 %v420, %v548
  %v550 = vsub.f32 1.0, %v549
  %v551 = vmul.f32 %v548, %v550
  %v552 = vadd.f32 %v548, %v551
  %vm553 = vweird.f32 %v420
  %vm554 = vweird.f32 %v548
  %vm555 = vmor %vm553, %vm554
  %v556 = vsel %vm555, %v548, %v552
  %v557 = vand.u32 2147483647, %v420
  %vm558 = vcmp.eq.f32.partialorder %v557, 8.507059e+37
  %v559 = vand.u32 %v420, 2147483648
  %v560 = vor.u32 1.1754944e-38, %v559
  %v561 = vsel %vm558, %v560, %v556
  %v562 = vmul.f32 1.0, %v561
  %v563 = vrcp.pop %v421
  %v564 = vmul.f32 %v421, %v563
  %v565 = vsub.f32 1.0, %v564
  %v566 = vmul.f32 %v563, %v565
  %v567 = vadd.f32 %v563, %v566
  %vm568 = vweird.f32 %v421
  %vm569 = vweird.f32 %v563
  %vm570 = vmor %vm568, %vm569
  %v571 = vsel %vm570, %v563, %v567
  %v572 = vand.u32 2147483647, %v421
  %vm573 = vcmp.eq.f32.partialorder %v572, 8.507059e+37
  %v574 = vand.u32 %v421, 2147483648
  %v575 = vor.u32 1.1754944e-38, %v574
  %v576 = vsel %vm573, %v575, %v571
  %v577 = vmul.f32 1.0, %v576
  %v578 = vrcp.pop %v422
  %v579 = vmul.f32 %v422, %v578
  %v580 = vsub.f32 1.0, %v579
  %v581 = vmul.f32 %v578, %v580
  %v582 = vadd.f32 %v578, %v581
  %vm583 = vweird.f32 %v422
  %vm584 = vweird.f32 %v578
  %vm585 = vmor %vm583, %vm584
  %v586 = vsel %vm585, %v578, %v582
  %v587 = vand.u32 2147483647, %v422
  %vm588 = vcmp.eq.f32.partialorder %v587, 8.507059e+37
  %v589 = vand.u32 %v422, 2147483648
  %v590 = vor.u32 1.1754944e-38, %v589
  %v591 = vsel %vm588, %v590, %v586
  %v592 = vmul.f32 1.0, %v591
  %v593 = vrcp.pop %v423
  %v594 = vmul.f32 %v423, %v593
  %v595 = vsub.f32 1.0, %v594
  %v596 = vmul.f32 %v593, %v595
  %v597 = vadd.f32 %v593, %v596
  %vm598 = vweird.f32 %v423
  %vm599 = vweird.f32 %v593
  %vm600 = vmor %vm598, %vm599
  %v601 = vsel %vm600, %v593, %v597
  %v602 = vand.u32 2147483647, %v423
  %vm603 = vcmp.eq.f32.partialorder %v602, 8.507059e+37
  %v604 = vand.u32 %v423, 2147483648
  %v605 = vor.u32 1.1754944e-38, %v604
  %v606 = vsel %vm603, %v605, %v601
  %v607 = vmul.f32 1.0, %v606
  %v608 = vrcp.pop %v424
  %v609 = vmul.f32 %v424, %v608
  %v610 = vsub.f32 1.0, %v609
  %v611 = vmul.f32 %v608, %v610
  %v612 = vadd.f32 %v608, %v611
  %vm613 = vweird.f32 %v424
  %vm614 = vweird.f32 %v608
  %vm615 = vmor %vm613, %vm614
  %v616 = vsel %vm615, %v608, %v612
  %v617 = vand.u32 2147483647, %v424
  %vm618 = vcmp.eq.f32.partialorder %v617, 8.507059e+37
  %v619 = vand.u32 %v424, 2147483648
  %v620 = vor.u32 1.1754944e-38, %v619
  %v621 = vsel %vm618, %v620, %v616
  %v622 = vmul.f32 1.0, %v621
  %v623 = vrcp.pop %v425
  %v624 = vmul.f32 %v425, %v623
  %v625 = vsub.f32 1.0, %v624
  %v626 = vmul.f32 %v623, %v625
  %v627 = vadd.f32 %v623, %v626
  %vm628 = vweird.f32 %v425
  %vm629 = vweird.f32 %v623
  %vm630 = vmor %vm628, %vm629
  %v631 = vsel %vm630, %v623, %v627
  %v632 = vand.u32 2147483647, %v425
  %vm633 = vcmp.eq.f32.partialorder %v632, 8.507059e+37
  %v634 = vand.u32 %v425, 2147483648
  %v635 = vor.u32 1.1754944e-38, %v634
  %v636 = vsel %vm633, %v635, %v631
  %v637 = vmul.f32 1.0, %v636
  %v638 = vrcp.pop %v426
  %v639 = vmul.f32 %v426, %v638
  %v640 = vsub.f32 1.0, %v639
  %v641 = vmul.f32 %v638, %v640
  %v642 = vadd.f32 %v638, %v641
  %vm643 = vweird.f32 %v426
  %vm644 = vweird.f32 %v638
  %vm645 = vmor %vm643, %vm644
  %v646 = vsel %vm645, %v638, %v642
  %v647 = vand.u32 2147483647, %v426
  %vm648 = vcmp.eq.f32.partialorder %v647, 8.507059e+37
  %v649 = vand.u32 %v426, 2147483648
  %v650 = vor.u32 1.1754944e-38, %v649
  %v651 = vsel %vm648, %v650, %v646
  %v652 = vmul.f32 1.0, %v651
  %v653 = vrcp.pop %v427
  %v654 = vmul.f32 %v427, %v653
  %v655 = vsub.f32 1.0, %v654
  %v656 = vmul.f32 %v653, %v655
  %v657 = vadd.f32 %v653, %v656
  %vm658 = vweird.f32 %v427
  %vm659 = vweird.f32 %v653
  %vm660 = vmor %vm658, %vm659
  %v661 = vsel %vm660, %v653, %v657
  %v662 = vand.u32 2147483647, %v427
  %vm663 = vcmp.eq.f32.partialorder %v662, 8.507059e+37
  %v664 = vand.u32 %v427, 2147483648
  %v665 = vor.u32 1.1754944e-38, %v664
  %v666 = vsel %vm663, %v665, %v661
  %v667 = vmul.f32 1.0, %v666
  %vm668 = vcmask 7168
  %669 = vst.msk [vmem:[%s7] sm:$0xff] %vm668, %v442
  %670 = vst.msk [vmem:[%s7 + $0x8] sm:$0xff] %vm668, %v457
  %671 = vst.msk [vmem:[%s7 + $0x10] sm:$0xff] %vm668, %v472
  %672 = vst.msk [vmem:[%s7 + $0x18] sm:$0xff] %vm668, %v487
  %673 = vst.msk [vmem:[%s7 + $0x20] sm:$0xff] %vm668, %v502
  %674 = vst.msk [vmem:[%s7 + $0x28] sm:$0xff] %vm668, %v517
  %675 = vst.msk [vmem:[%s7 + $0x30] sm:$0xff] %vm668, %v532
  %676 = vst.msk [vmem:[%s7 + $0x38] sm:$0xff] %vm668, %v547
  %677 = vst.msk [vmem:[%s7 + $0x40] sm:$0xff] %vm668, %v562
  %678 = vst.msk [vmem:[%s7 + $0x48] sm:$0xff] %vm668, %v577
  %679 = vst.msk [vmem:[%s7 + $0x50] sm:$0xff] %vm668, %v592
  %680 = vst.msk [vmem:[%s7 + $0x58] sm:$0xff] %vm668, %v607
  %681 = vst.msk [vmem:[%s7 + $0x60] sm:$0xff] %vm668, %v622
  %682 = vst.msk [vmem:[%s7 + $0x68] sm:$0xff] %vm668, %v637
  %683 = vst.msk [vmem:[%s7 + $0x70] sm:$0xff] %vm668, %v652
  %684 = vst.msk [vmem:[%s7 + $0x78] sm:$0xff] %vm668, %v667
  // Predicated region
  $region30: #{tpu_custom_call.1} parent=0 // pred_check
    _
  $region31: #{tpu_custom_call.1} parent=0 // pred_check_branch
    %686 = sbr.rel (0) target = $region33
  $region32: #{tpu_custom_call.1} parent=0 // pred_region
    _
  $region33: #{tpu_custom_call.1} parent=0 // pred_fallthru
    _
  // Predicated region
  $region34: #{tpu_custom_call.1} parent=0 // pred_check
    _
  $region35: #{tpu_custom_call.1} parent=0 // pred_check_branch
    %688 = sbr.rel (0) target = $region37
  $region36: #{tpu_custom_call.1} parent=0 // pred_region
    _
  $region37: #{tpu_custom_call.1} parent=0 // pred_fallthru
    _

// kernel: tpu_custom_call.1
$region0: #{tpu_custom_call.1}
  #allocation0 [shape = 'u32[]', space=smem, size = 0x4, offset = 0x4, fixed_abs, tag = 'smem constant byte address 0x4 - core index']
  #allocation1 [shape = 'u32[72,128]{1,0:T(1,128)}', space=vmem, size = 0x9000, scoped, tag = 'internal scratch']
  #allocation2 [shape = 'f32[1,1]{1,0:T(1,128)S(6)}', space=smem, size = 0x200, scoped, tag = 'scoped memory for tpu_custom_call.1']
  %s0 = inlined_call_operand.vmem [shape: f32[128,32], index: 0, kind: input, shape index: {}]
  %s1 = inlined_call_operand.vmem [shape: bf16[32,32], index: 1, kind: input, shape index: {}]
  %s2 = inlined_call_operand.vmem [shape: f32[1,32], index: 2, kind: input, shape index: {}]
  %s3 = inlined_call_operand.vmem [shape: bf16[32,32], index: 3, kind: input, shape index: {}]
  %s4 = inlined_call_operand.vmem [shape: f32[1,32], index: 4, kind: input, shape index: {}]
  %s5 = inlined_call_operand.vmem [shape: bf16[1,32], index: 5, kind: input, shape index: {}]
  %s6 = inlined_call_operand.<no memory space> [shape: f32[1,1], index: 6, kind: input, shape index: {}]
  %s7 = inlined_call_operand.vmem [shape: f32[128,1], index: 7, kind: output, shape index: {}]
  %s8 = sld [smem:[#allocation0]]
  $region38: #{tpu_custom_call.1} parent=0
    _
  %s10 = ssub.s32 1, %s8
  %s11 = scalar_select 0, %s10, %s8
  %12 = sst [smem:[#allocation2]] %s6
  // Predicated region
  $region2: #{tpu_custom_call.1} parent=0 // pred_check
    _
  $region3: #{tpu_custom_call.1} parent=0 // pred_check_branch
    %14 = sbr.rel (0) target = $region5
  $region4: #{tpu_custom_call.1} parent=0 // pred_region
    _
  $region5: #{tpu_custom_call.1} parent=0 // pred_fallthru
    _
  // Predicated region
  $region6: #{tpu_custom_call.1} parent=0 // pred_check
    _
  $region7: #{tpu_custom_call.1} parent=0 // pred_check_branch
    %16 = sbr.rel (0) target = $region9
  $region8: #{tpu_custom_call.1} parent=0 // pred_region
    _
  $region9: #{tpu_custom_call.1} parent=0 // pred_fallthru
    _
  // Predicated region
  $region10: #{tpu_custom_call.1} parent=0 // pred_check
    _
  $region11: #{tpu_custom_call.1} parent=0 // pred_check_branch
    %18 = sbr.rel (0) target = $region13
  $region12: #{tpu_custom_call.1} parent=0 // pred_region
    _
  $region13: #{tpu_custom_call.1} parent=0 // pred_fallthru
    _
  // Predicated region
  $region14: #{tpu_custom_call.1} parent=0 // pred_check
    _
  $region15: #{tpu_custom_call.1} parent=0 // pred_check_branch
    %20 = sbr.rel (0) target = $region17
  $region16: #{tpu_custom_call.1} parent=0 // pred_region
    _
  $region17: #{tpu_custom_call.1} parent=0 // pred_fallthru
    _
  // Predicated region
  $region18: #{tpu_custom_call.1} parent=0 // pred_check
    _
  $region19: #{tpu_custom_call.1} parent=0 // pred_check_branch
    %22 = sbr.rel (0) target = $region21
  $region20: #{tpu_custom_call.1} parent=0 // pred_region
    _
  $region21: #{tpu_custom_call.1} parent=0 // pred_fallthru
    _
  // Predicated region
  $region22: #{tpu_custom_call.1} parent=0 // pred_check
    _
  $region23: #{tpu_custom_call.1} parent=0 // pred_check_branch
    %24 = sbr.rel (0) target = $region25
  $region24: #{tpu_custom_call.1} parent=0 // pred_region
    _
  $region25: #{tpu_custom_call.1} parent=0 // pred_fallthru
    _
  // Predicated region
  $region26: #{tpu_custom_call.1} parent=0 // pred_check
    _
  $region27: #{tpu_custom_call.1} parent=0 // pred_check_branch
    %26 = sbr.rel (0) target = $region29
  $region28: #{tpu_custom_call.1} parent=0 // pred_region
    _
  $region29: #{tpu_custom_call.1} parent=0 // pred_fallthru
    _
  %v28 = vld [vmem:[%s0] sm:$0xff]
  %v29 = vld [vmem:[%s0 + $0x8] sm:$0xff]
  %v30 = vld [vmem:[%s0 + $0x10] sm:$0xff]
  %v31 = vld [vmem:[%s0 + $0x18] sm:$0xff]
  %v32 = vld [vmem:[%s0 + $0x20] sm:$0xff]
  %v33 = vld [vmem:[%s0 + $0x28] sm:$0xff]
  %v34 = vld [vmem:[%s0 + $0x30] sm:$0xff]
  %v35 = vld [vmem:[%s0 + $0x38] sm:$0xff]
  %v36 = vld [vmem:[%s0 + $0x40] sm:$0xff]
  %v37 = vld [vmem:[%s0 + $0x48] sm:$0xff]
  %v38 = vld [vmem:[%s0 + $0x50] sm:$0xff]
  %v39 = vld [vmem:[%s0 + $0x58] sm:$0xff]
  %v40 = vld [vmem:[%s0 + $0x60] sm:$0xff]
  %v41 = vld [vmem:[%s0 + $0x68] sm:$0xff]
  %v42 = vld [vmem:[%s0 + $0x70] sm:$0xff]
  %v43 = vld [vmem:[%s0 + $0x78] sm:$0xff]
  %v44 = vpack.c.bf16 %v29, %v28
  %v45 = vpack.c.bf16 %v31, %v30
  %v46 = vpack.c.bf16 %v33, %v32
  %v47 = vpack.c.bf16 %v35, %v34
  %v48 = vpack.c.bf16 %v37, %v36
  %v49 = vpack.c.bf16 %v39, %v38
  %v50 = vpack.c.bf16 %v41, %v40
  %v51 = vpack.c.bf16 %v43, %v42
  %v52 = vld [vmem:[%s1] sm:$0xf]
  %v53 = vld [vmem:[%s1 + $0x4] sm:$0xf]
  %v54 = vld [vmem:[%s1 + $0x8] sm:$0xf]
  %v55 = vld [vmem:[%s1 + $0xc] sm:$0xf]
  %v56 = vld [vmem:[%s2] sm:$0x1]
  %v58 = vperm.slane %v56, 0
  %v64 = vunpack.c.l.b16 %v52
  %v65 = vunpack.c.l.b16 %v53
  %v66 = vunpack.c.l.b16 %v54
  %v67 = vunpack.c.l.b16 %v55
  %v68 = vpack.c.b16 %v65, %v64
  %v69 = vpack.c.b16 %v67, %v66
  %vm72 = vcmask 261120
  %v74 = vsel %vm72, %v44, 0
  %v77 = vsel %vm72, %v45, 0
  %v80 = vsel %vm72, %v46, 0
  %v83 = vsel %vm72, %v47, 0
  %v86 = vsel %vm72, %v48, 0
  %v89 = vsel %vm72, %v49, 0
  %v92 = vsel %vm72, %v50, 0
  %v95 = vsel %vm72, %v51, 0
  %97 = vmatpush.bf16.msra.mxu0 0
  %98 = vmatpush.bf16.msra.mxu0 0
  %99 = vmatpush.bf16.msra.mxu0 0
  %100 = vmatpush.bf16.msra.mxu0 0
  %101 = vmatpush.bf16.msra.mxu0 0
  %102 = vmatpush.bf16.msra.mxu0 0
  %103 = vmatpush.bf16.msra.mxu0 %v69
  %104 = vmatpush.bf16.msra.mxu0 %v68
  %105 = vmatmul.bf16.gmra.mxu0 %v74
  %v106 = vpop.f32.mrf.mxu0
  %v107 = vadd.f32 %v58, %v106
  %v108 = vpop.f32.mrf.mxu0
  %v109 = vadd.f32 %v58, %v108
  %110 = vmatmul.bf16.gmra.mxu0 %v77
  %v111 = vpop.f32.mrf.mxu0
  %v112 = vadd.f32 %v58, %v111
  %v113 = vpop.f32.mrf.mxu0
  %v114 = vadd.f32 %v58, %v113
  %115 = vmatmul.bf16.gmra.mxu0 %v80
  %v116 = vpop.f32.mrf.mxu0
  %v117 = vadd.f32 %v58, %v116
  %v118 = vpop.f32.mrf.mxu0
  %v119 = vadd.f32 %v58, %v118
  %120 = vmatmul.bf16.gmra.mxu0 %v83
  %v121 = vpop.f32.mrf.mxu0
  %v122 = vadd.f32 %v58, %v121
  %v123 = vpop.f32.mrf.mxu0
  %v124 = vadd.f32 %v58, %v123
  %125 = vmatmul.bf16.gmra.mxu0 %v86
  %v126 = vpop.f32.mrf.mxu0
  %v127 = vadd.f32 %v58, %v126
  %v128 = vpop.f32.mrf.mxu0
  %v129 = vadd.f32 %v58, %v128
  %130 = vmatmul.bf16.gmra.mxu0 %v89
  %v131 = vpop.f32.mrf.mxu0
  %v132 = vadd.f32 %v58, %v131
  %v133 = vpop.f32.mrf.mxu0
  %v134 = vadd.f32 %v58, %v133
  %135 = vmatmul.bf16.gmra.mxu0 %v92
  %v136 = vpop.f32.mrf.mxu0
  %v137 = vadd.f32 %v58, %v136
  %v138 = vpop.f32.mrf.mxu0
  %v139 = vadd.f32 %v58, %v138
  %140 = vmatmul.bf16.gmra.mxu0 %v95
  %v141 = vpop.f32.mrf.mxu0
  %v142 = vadd.f32 %v58, %v141
  %v143 = vpop.f32.mrf.mxu0
  %v144 = vadd.f32 %v58, %v143
  %145 = vdwg.mxu0
  %v146 = vmax.f32 %v107, 0.0
  %v147 = vmax.f32 %v109, 0.0
  %v148 = vmax.f32 %v112, 0.0
  %v149 = vmax.f32 %v114, 0.0
  %v150 = vmax.f32 %v117, 0.0
  %v151 = vmax.f32 %v119, 0.0
  %v152 = vmax.f32 %v122, 0.0
  %v153 = vmax.f32 %v124, 0.0
  %v154 = vmax.f32 %v127, 0.0
  %v155 = vmax.f32 %v129, 0.0
  %v156 = vmax.f32 %v132, 0.0
  %v157 = vmax.f32 %v134, 0.0
  %v158 = vmax.f32 %v137, 0.0
  %v159 = vmax.f32 %v139, 0.0
  %v160 = vmax.f32 %v142, 0.0
  %v161 = vmax.f32 %v144, 0.0
  %v162 = vpack.c.bf16 %v147, %v146
  %v163 = vpack.c.bf16 %v149, %v148
  %v164 = vpack.c.bf16 %v151, %v150
  %v165 = vpack.c.bf16 %v153, %v152
  %v166 = vpack.c.bf16 %v155, %v154
  %v167 = vpack.c.bf16 %v157, %v156
  %v168 = vpack.c.bf16 %v159, %v158
  %v169 = vpack.c.bf16 %v161, %v160
  %v170 = vld [vmem:[%s3] sm:$0xf]
  %v171 = vld [vmem:[%s3 + $0x4] sm:$0xf]
  %v172 = vld [vmem:[%s3 + $0x8] sm:$0xf]
  %v173 = vld [vmem:[%s3 + $0xc] sm:$0xf]
  %v174 = vld [vmem:[%s4] sm:$0x1]
  %v176 = vperm.slane %v174, 0
  %v182 = vunpack.c.l.b16 %v170
  %v183 = vunpack.c.l.b16 %v171
  %v184 = vunpack.c.l.b16 %v172
  %v185 = vunpack.c.l.b16 %v173
  %v186 = vpack.c.b16 %v183, %v182
  %v187 = vpack.c.b16 %v185, %v184
  %v191 = vsel %vm72, %v162, 0
  %v194 = vsel %vm72, %v163, 0
  %v197 = vsel %vm72, %v164, 0
  %v200 = vsel %vm72, %v165, 0
  %v203 = vsel %vm72, %v166, 0
  %v206 = vsel %vm72, %v167, 0
  %v209 = vsel %vm72, %v168, 0
  %v212 = vsel %vm72, %v169, 0
  %214 = vmatpush.bf16.msra.mxu0 0
  %215 = vmatpush.bf16.msra.mxu0 0
  %216 = vmatpush.bf16.msra.mxu0 0
  %217 = vmatpush.bf16.msra.mxu0 0
  %218 = vmatpush.bf16.msra.mxu0 0
  %219 = vmatpush.bf16.msra.mxu0 0
  %220 = vmatpush.bf16.msra.mxu0 %v187
  %221 = vmatpush.bf16.msra.mxu0 %v186
  %222 = vmatmul.bf16.gmra.mxu0 %v191
  %v223 = vpop.f32.mrf.mxu0
  %v224 = vadd.f32 %v176, %v223
  %v225 = vpop.f32.mrf.mxu0
  %v226 = vadd.f32 %v176, %v225
  %227 = vmatmul.bf16.gmra.mxu0 %v194
  %v228 = vpop.f32.mrf.mxu0
  %v229 = vadd.f32 %v176, %v228
  %v230 = vpop.f32.mrf.mxu0
  %v231 = vadd.f32 %v176, %v230
  %232 = vmatmul.bf16.gmra.mxu0 %v197
  %v233 = vpop.f32.mrf.mxu0
  %v234 = vadd.f32 %v176, %v233
  %v235 = vpop.f32.mrf.mxu0
  %v236 = vadd.f32 %v176, %v235
  %237 = vmatmul.bf16.gmra.mxu0 %v200
  %v238 = vpop.f32.mrf.mxu0
  %v239 = vadd.f32 %v176, %v238
  %v240 = vpop.f32.mrf.mxu0
  %v241 = vadd.f32 %v176, %v240
  %242 = vmatmul.bf16.gmra.mxu0 %v203
  %v243 = vpop.f32.mrf.mxu0
  %v244 = vadd.f32 %v176, %v243
  %v245 = vpop.f32.mrf.mxu0
  %v246 = vadd.f32 %v176, %v245
  %247 = vmatmul.bf16.gmra.mxu0 %v206
  %v248 = vpop.f32.mrf.mxu0
  %v249 = vadd.f32 %v176, %v248
  %v250 = vpop.f32.mrf.mxu0
  %v251 = vadd.f32 %v176, %v250
  %252 = vmatmul.bf16.gmra.mxu0 %v209
  %v253 = vpop.f32.mrf.mxu0
  %v254 = vadd.f32 %v176, %v253
  %v255 = vpop.f32.mrf.mxu0
  %v256 = vadd.f32 %v176, %v255
  %257 = vmatmul.bf16.gmra.mxu0 %v212
  %v258 = vpop.f32.mrf.mxu0
  %v259 = vadd.f32 %v176, %v258
  %v260 = vpop.f32.mrf.mxu0
  %v261 = vadd.f32 %v176, %v260
  %262 = vdwg.mxu0
  %v263 = vmax.f32 %v224, 0.0
  %v264 = vmax.f32 %v226, 0.0
  %v265 = vmax.f32 %v229, 0.0
  %v266 = vmax.f32 %v231, 0.0
  %v267 = vmax.f32 %v234, 0.0
  %v268 = vmax.f32 %v236, 0.0
  %v269 = vmax.f32 %v239, 0.0
  %v270 = vmax.f32 %v241, 0.0
  %v271 = vmax.f32 %v244, 0.0
  %v272 = vmax.f32 %v246, 0.0
  %v273 = vmax.f32 %v249, 0.0
  %v274 = vmax.f32 %v251, 0.0
  %v275 = vmax.f32 %v254, 0.0
  %v276 = vmax.f32 %v256, 0.0
  %v277 = vmax.f32 %v259, 0.0
  %v278 = vmax.f32 %v261, 0.0
  %v279 = vld [vmem:[%s5] sm:$0x1]
  %v280 = vunpack.c.l.bf16 %v279
  %v281 = vperm.slane %v280, 0
  %v282 = vmul.f32 %v263, %v281
  %v283 = vmul.f32 %v264, %v281
  %v284 = vmul.f32 %v265, %v281
  %v285 = vmul.f32 %v266, %v281
  %v286 = vmul.f32 %v267, %v281
  %v287 = vmul.f32 %v268, %v281
  %v288 = vmul.f32 %v269, %v281
  %v289 = vmul.f32 %v270, %v281
  %v290 = vmul.f32 %v271, %v281
  %v291 = vmul.f32 %v272, %v281
  %v292 = vmul.f32 %v273, %v281
  %v293 = vmul.f32 %v274, %v281
  %v294 = vmul.f32 %v275, %v281
  %v295 = vmul.f32 %v276, %v281
  %v296 = vmul.f32 %v277, %v281
  %v297 = vmul.f32 %v278, %v281
  %v298 = vsel %vm72, %v282, 0.0
  %299 = vadd.xlane.f32.xlu0 %v298
  %v300 = vpop.xlane.xlu0 %299
  %v301 = vsel %vm72, %v283, 0.0
  %302 = vadd.xlane.f32.xlu0 %v301
  %v303 = vpop.xlane.xlu0 %302
  %v304 = vsel %vm72, %v284, 0.0
  %305 = vadd.xlane.f32.xlu0 %v304
  %v306 = vpop.xlane.xlu0 %305
  %v307 = vsel %vm72, %v285, 0.0
  %308 = vadd.xlane.f32.xlu0 %v307
  %v309 = vpop.xlane.xlu0 %308
  %v310 = vsel %vm72, %v286, 0.0
  %311 = vadd.xlane.f32.xlu0 %v310
  %v312 = vpop.xlane.xlu0 %311
  %v313 = vsel %vm72, %v287, 0.0
  %314 = vadd.xlane.f32.xlu0 %v313
  %v315 = vpop.xlane.xlu0 %314
  %v316 = vsel %vm72, %v288, 0.0
  %317 = vadd.xlane.f32.xlu0 %v316
  %v318 = vpop.xlane.xlu0 %317
  %v319 = vsel %vm72, %v289, 0.0
  %320 = vadd.xlane.f32.xlu0 %v319
  %v321 = vpop.xlane.xlu0 %320
  %v322 = vsel %vm72, %v290, 0.0
  %323 = vadd.xlane.f32.xlu0 %v322
  %v324 = vpop.xlane.xlu0 %323
  %v325 = vsel %vm72, %v291, 0.0
  %326 = vadd.xlane.f32.xlu0 %v325
  %v327 = vpop.xlane.xlu0 %326
  %v328 = vsel %vm72, %v292, 0.0
  %329 = vadd.xlane.f32.xlu0 %v328
  %v330 = vpop.xlane.xlu0 %329
  %v331 = vsel %vm72, %v293, 0.0
  %332 = vadd.xlane.f32.xlu0 %v331
  %v333 = vpop.xlane.xlu0 %332
  %v334 = vsel %vm72, %v294, 0.0
  %335 = vadd.xlane.f32.xlu0 %v334
  %v336 = vpop.xlane.xlu0 %335
  %v337 = vsel %vm72, %v295, 0.0
  %338 = vadd.xlane.f32.xlu0 %v337
  %v339 = vpop.xlane.xlu0 %338
  %v340 = vsel %vm72, %v296, 0.0
  %341 = vadd.xlane.f32.xlu0 %v340
  %v342 = vpop.xlane.xlu0 %341
  %v343 = vsel %vm72, %v297, 0.0
  %344 = vadd.xlane.f32.xlu0 %v343
  %v345 = vpop.xlane.xlu0 %344
  %s346 = sld [smem:[#allocation2]]
  %v347 = vstv %s346
  %v348 = vadd.f32 %v300, %v347
  %v349 = vadd.f32 %v303, %v347
  %v350 = vadd.f32 %v306, %v347
  %v351 = vadd.f32 %v309, %v347
  %v352 = vadd.f32 %v312, %v347
  %v353 = vadd.f32 %v315, %v347
  %v354 = vadd.f32 %v318, %v347
  %v355 = vadd.f32 %v321, %v347
  %v356 = vadd.f32 %v324, %v347
  %v357 = vadd.f32 %v327, %v347
  %v358 = vadd.f32 %v330, %v347
  %v359 = vadd.f32 %v333, %v347
  %v360 = vadd.f32 %v336, %v347
  %v361 = vadd.f32 %v339, %v347
  %v362 = vadd.f32 %v342, %v347
  %v363 = vadd.f32 %v345, %v347
  %v364 = vxor.u32 %v348, 2147483648
  %v365 = vxor.u32 %v349, 2147483648
  %v366 = vxor.u32 %v350, 2147483648
  %v367 = vxor.u32 %v351, 2147483648
  %v368 = vxor.u32 %v352, 2147483648
  %v369 = vxor.u32 %v353, 2147483648
  %v370 = vxor.u32 %v354, 2147483648
  %v371 = vxor.u32 %v355, 2147483648
  %v372 = vxor.u32 %v356, 2147483648
  %v373 = vxor.u32 %v357, 2147483648
  %v374 = vxor.u32 %v358, 2147483648
  %v375 = vxor.u32 %v359, 2147483648
  %v376 = vxor.u32 %v360, 2147483648
  %v377 = vxor.u32 %v361, 2147483648
  %v378 = vxor.u32 %v362, 2147483648
  %v379 = vxor.u32 %v363, 2147483648
  %v380 = vmul.f32 %v364, 1.442695
  %v381 = vpow.pop %v380
  %v382 = vmul.f32 %v365, 1.442695
  %v383 = vpow.pop %v382
  %v384 = vmul.f32 %v366, 1.442695
  %v385 = vpow.pop %v384
  %v386 = vmul.f32 %v367, 1.442695
  %v387 = vpow.pop %v386
  %v388 = vmul.f32 %v368, 1.442695
  %v389 = vpow.pop %v388
  %v390 = vmul.f32 %v369, 1.442695
  %v391 = vpow.pop %v390
  %v392 = vmul.f32 %v370, 1.442695
  %v393 = vpow.pop %v392
  %v394 = vmul.f32 %v371, 1.442695
  %v395 = vpow.pop %v394
  %v396 = vmul.f32 %v372, 1.442695
  %v397 = vpow.pop %v396
  %v398 = vmul.f32 %v373, 1.442695
  %v399 = vpow.pop %v398
  %v400 = vmul.f32 %v374, 1.442695
  %v401 = vpow.pop %v400
  %v402 = vmul.f32 %v375, 1.442695
  %v403 = vpow.pop %v402
  %v404 = vmul.f32 %v376, 1.442695
  %v405 = vpow.pop %v404
  %v406 = vmul.f32 %v377, 1.442695
  %v407 = vpow.pop %v406
  %v408 = vmul.f32 %v378, 1.442695
  %v409 = vpow.pop %v408
  %v410 = vmul.f32 %v379, 1.442695
  %v411 = vpow.pop %v410
  %v412 = vadd.f32 %v381, 1.0
  %v413 = vadd.f32 %v383, 1.0
  %v414 = vadd.f32 %v385, 1.0
  %v415 = vadd.f32 %v387, 1.0
  %v416 = vadd.f32 %v389, 1.0
  %v417 = vadd.f32 %v391, 1.0
  %v418 = vadd.f32 %v393, 1.0
  %v419 = vadd.f32 %v395, 1.0
  %v420 = vadd.f32 %v397, 1.0
  %v421 = vadd.f32 %v399, 1.0
  %v422 = vadd.f32 %v401, 1.0
  %v423 = vadd.f32 %v403, 1.0
  %v424 = vadd.f32 %v405, 1.0
  %v425 = vadd.f32 %v407, 1.0
  %v426 = vadd.f32 %v409, 1.0
  %v427 = vadd.f32 %v411, 1.0
  %v428 = vrcp.pop %v412
  %v429 = vmul.f32 %v412, %v428
  %v430 = vsub.f32 1.0, %v429
  %v431 = vmul.f32 %v428, %v430
  %v432 = vadd.f32 %v428, %v431
  %vm433 = vweird.f32 %v412
  %vm434 = vweird.f32 %v428
  %vm435 = vmor %vm433, %vm434
  %v436 = vsel %vm435, %v428, %v432
  %v437 = vand.u32 2147483647, %v412
  %vm438 = vcmp.eq.f32.partialorder %v437, 8.507059e+37
  %v439 = vand.u32 %v412, 2147483648
  %v440 = vor.u32 1.1754944e-38, %v439
  %v441 = vsel %vm438, %v440, %v436
  %v442 = vmul.f32 1.0, %v441
  %v443 = vrcp.pop %v413
  %v444 = vmul.f32 %v413, %v443
  %v445 = vsub.f32 1.0, %v444
  %v446 = vmul.f32 %v443, %v445
  %v447 = vadd.f32 %v443, %v446
  %vm448 = vweird.f32 %v413
  %vm449 = vweird.f32 %v443
  %vm450 = vmor %vm448, %vm449
  %v451 = vsel %vm450, %v443, %v447
  %v452 = vand.u32 2147483647, %v413
  %vm453 = vcmp.eq.f32.partialorder %v452, 8.507059e+37
  %v454 = vand.u32 %v413, 2147483648
  %v455 = vor.u32 1.1754944e-38, %v454
  %v456 = vsel %vm453, %v455, %v451
  %v457 = vmul.f32 1.0, %v456
  %v458 = vrcp.pop %v414
  %v459 = vmul.f32 %v414, %v458
  %v460 = vsub.f32 1.0, %v459
  %v461 = vmul.f32 %v458, %v460
  %v462 = vadd.f32 %v458, %v461
  %vm463 = vweird.f32 %v414
  %vm464 = vweird.f32 %v458
  %vm465 = vmor %vm463, %vm464
  %v466 = vsel %vm465, %v458, %v462
  %v467 = vand.u32 2147483647, %v414
  %vm468 = vcmp.eq.f32.partialorder %v467, 8.507059e+37
  %v469 = vand.u32 %v414, 2147483648
  %v470 = vor.u32 1.1754944e-38, %v469
  %v471 = vsel %vm468, %v470, %v466
  %v472 = vmul.f32 1.0, %v471
  %v473 = vrcp.pop %v415
  %v474 = vmul.f32 %v415, %v473
  %v475 = vsub.f32 1.0, %v474
  %v476 = vmul.f32 %v473, %v475
  %v477 = vadd.f32 %v473, %v476
  %vm478 = vweird.f32 %v415
  %vm479 = vweird.f32 %v473
  %vm480 = vmor %vm478, %vm479
  %v481 = vsel %vm480, %v473, %v477
  %v482 = vand.u32 2147483647, %v415
  %vm483 = vcmp.eq.f32.partialorder %v482, 8.507059e+37
  %v484 = vand.u32 %v415, 2147483648
  %v485 = vor.u32 1.1754944e-38, %v484
  %v486 = vsel %vm483, %v485, %v481
  %v487 = vmul.f32 1.0, %v486
  %v488 = vrcp.pop %v416
  %v489 = vmul.f32 %v416, %v488
  %v490 = vsub.f32 1.0, %v489
  %v491 = vmul.f32 %v488, %v490
  %v492 = vadd.f32 %v488, %v491
  %vm493 = vweird.f32 %v416
  %vm494 = vweird.f32 %v488
  %vm495 = vmor %vm493, %vm494
  %v496 = vsel %vm495, %v488, %v492
  %v497 = vand.u32 2147483647, %v416
  %vm498 = vcmp.eq.f32.partialorder %v497, 8.507059e+37
  %v499 = vand.u32 %v416, 2147483648
  %v500 = vor.u32 1.1754944e-38, %v499
  %v501 = vsel %vm498, %v500, %v496
  %v502 = vmul.f32 1.0, %v501
  %v503 = vrcp.pop %v417
  %v504 = vmul.f32 %v417, %v503
  %v505 = vsub.f32 1.0, %v504
  %v506 = vmul.f32 %v503, %v505
  %v507 = vadd.f32 %v503, %v506
  %vm508 = vweird.f32 %v417
  %vm509 = vweird.f32 %v503
  %vm510 = vmor %vm508, %vm509
  %v511 = vsel %vm510, %v503, %v507
  %v512 = vand.u32 2147483647, %v417
  %vm513 = vcmp.eq.f32.partialorder %v512, 8.507059e+37
  %v514 = vand.u32 %v417, 2147483648
  %v515 = vor.u32 1.1754944e-38, %v514
  %v516 = vsel %vm513, %v515, %v511
  %v517 = vmul.f32 1.0, %v516
  %v518 = vrcp.pop %v418
  %v519 = vmul.f32 %v418, %v518
  %v520 = vsub.f32 1.0, %v519
  %v521 = vmul.f32 %v518, %v520
  %v522 = vadd.f32 %v518, %v521
  %vm523 = vweird.f32 %v418
  %vm524 = vweird.f32 %v518
  %vm525 = vmor %vm523, %vm524
  %v526 = vsel %vm525, %v518, %v522
  %v527 = vand.u32 2147483647, %v418
  %vm528 = vcmp.eq.f32.partialorder %v527, 8.507059e+37
  %v529 = vand.u32 %v418, 2147483648
  %v530 = vor.u32 1.1754944e-38, %v529
  %v531 = vsel %vm528, %v530, %v526
  %v532 = vmul.f32 1.0, %v531
  %v533 = vrcp.pop %v419
  %v534 = vmul.f32 %v419, %v533
  %v535 = vsub.f32 1.0, %v534
  %v536 = vmul.f32 %v533, %v535
  %v537 = vadd.f32 %v533, %v536
  %vm538 = vweird.f32 %v419
  %vm539 = vweird.f32 %v533
  %vm540 = vmor %vm538, %vm539
  %v541 = vsel %vm540, %v533, %v537
  %v542 = vand.u32 2147483647, %v419
  %vm543 = vcmp.eq.f32.partialorder %v542, 8.507059e+37
  %v544 = vand.u32 %v419, 2147483648
  %v545 = vor.u32 1.1754944e-38, %v544
  %v546 = vsel %vm543, %v545, %v541
  %v547 = vmul.f32 1.0, %v546
  %v548 = vrcp.pop %v420
  %v549 = vmul.f32 %v420, %v548
  %v550 = vsub.f32 1.0, %v549
  %v551 = vmul.f32 %v548, %v550
  %v552 = vadd.f32 %v548, %v551
  %vm553 = vweird.f32 %v420
  %vm554 = vweird.f32 %v548
  %vm555 = vmor %vm553, %vm554
  %v556 = vsel %vm555, %v548, %v552
  %v557 = vand.u32 2147483647, %v420
  %vm558 = vcmp.eq.f32.partialorder %v557, 8.507059e+37
  %v559 = vand.u32 %v420, 2147483648
  %v560 = vor.u32 1.1754944e-38, %v559
  %v561 = vsel %vm558, %v560, %v556
  %v562 = vmul.f32 1.0, %v561
  %v563 = vrcp.pop %v421
  %v564 = vmul.f32 %v421, %v563
  %v565 = vsub.f32 1.0, %v564
  %v566 = vmul.f32 %v563, %v565
  %v567 = vadd.f32 %v563, %v566
  %vm568 = vweird.f32 %v421
  %vm569 = vweird.f32 %v563
  %vm570 = vmor %vm568, %vm569
  %v571 = vsel %vm570, %v563, %v567
  %v572 = vand.u32 2147483647, %v421
  %vm573 = vcmp.eq.f32.partialorder %v572, 8.507059e+37
  %v574 = vand.u32 %v421, 2147483648
  %v575 = vor.u32 1.1754944e-38, %v574
  %v576 = vsel %vm573, %v575, %v571
  %v577 = vmul.f32 1.0, %v576
  %v578 = vrcp.pop %v422
  %v579 = vmul.f32 %v422, %v578
  %v580 = vsub.f32 1.0, %v579
  %v581 = vmul.f32 %v578, %v580
  %v582 = vadd.f32 %v578, %v581
  %vm583 = vweird.f32 %v422
  %vm584 = vweird.f32 %v578
  %vm585 = vmor %vm583, %vm584
  %v586 = vsel %vm585, %v578, %v582
  %v587 = vand.u32 2147483647, %v422
  %vm588 = vcmp.eq.f32.partialorder %v587, 8.507059e+37
  %v589 = vand.u32 %v422, 2147483648
  %v590 = vor.u32 1.1754944e-38, %v589
  %v591 = vsel %vm588, %v590, %v586
  %v592 = vmul.f32 1.0, %v591
  %v593 = vrcp.pop %v423
  %v594 = vmul.f32 %v423, %v593
  %v595 = vsub.f32 1.0, %v594
  %v596 = vmul.f32 %v593, %v595
  %v597 = vadd.f32 %v593, %v596
  %vm598 = vweird.f32 %v423
  %vm599 = vweird.f32 %v593
  %vm600 = vmor %vm598, %vm599
  %v601 = vsel %vm600, %v593, %v597
  %v602 = vand.u32 2147483647, %v423
  %vm603 = vcmp.eq.f32.partialorder %v602, 8.507059e+37
  %v604 = vand.u32 %v423, 2147483648
  %v605 = vor.u32 1.1754944e-38, %v604
  %v606 = vsel %vm603, %v605, %v601
  %v607 = vmul.f32 1.0, %v606
  %v608 = vrcp.pop %v424
  %v609 = vmul.f32 %v424, %v608
  %v610 = vsub.f32 1.0, %v609
  %v611 = vmul.f32 %v608, %v610
  %v612 = vadd.f32 %v608, %v611
  %vm613 = vweird.f32 %v424
  %vm614 = vweird.f32 %v608
  %vm615 = vmor %vm613, %vm614
  %v616 = vsel %vm615, %v608, %v612
  %v617 = vand.u32 2147483647, %v424
  %vm618 = vcmp.eq.f32.partialorder %v617, 8.507059e+37
  %v619 = vand.u32 %v424, 2147483648
  %v620 = vor.u32 1.1754944e-38, %v619
  %v621 = vsel %vm618, %v620, %v616
  %v622 = vmul.f32 1.0, %v621
  %v623 = vrcp.pop %v425
  %v624 = vmul.f32 %v425, %v623
  %v625 = vsub.f32 1.0, %v624
  %v626 = vmul.f32 %v623, %v625
  %v627 = vadd.f32 %v623, %v626
  %vm628 = vweird.f32 %v425
  %vm629 = vweird.f32 %v623
  %vm630 = vmor %vm628, %vm629
  %v631 = vsel %vm630, %v623, %v627
  %v632 = vand.u32 2147483647, %v425
  %vm633 = vcmp.eq.f32.partialorder %v632, 8.507059e+37
  %v634 = vand.u32 %v425, 2147483648
  %v635 = vor.u32 1.1754944e-38, %v634
  %v636 = vsel %vm633, %v635, %v631
  %v637 = vmul.f32 1.0, %v636
  %v638 = vrcp.pop %v426
  %v639 = vmul.f32 %v426, %v638
  %v640 = vsub.f32 1.0, %v639
  %v641 = vmul.f32 %v638, %v640
  %v642 = vadd.f32 %v638, %v641
  %vm643 = vweird.f32 %v426
  %vm644 = vweird.f32 %v638
  %vm645 = vmor %vm643, %vm644
  %v646 = vsel %vm645, %v638, %v642
  %v647 = vand.u32 2147483647, %v426
  %vm648 = vcmp.eq.f32.partialorder %v647, 8.507059e+37
  %v649 = vand.u32 %v426, 2147483648
  %v650 = vor.u32 1.1754944e-38, %v649
  %v651 = vsel %vm648, %v650, %v646
  %v652 = vmul.f32 1.0, %v651
  %v653 = vrcp.pop %v427
  %v654 = vmul.f32 %v427, %v653
  %v655 = vsub.f32 1.0, %v654
  %v656 = vmul.f32 %v653, %v655
  %v657 = vadd.f32 %v653, %v656
  %vm658 = vweird.f32 %v427
  %vm659 = vweird.f32 %v653
  %vm660 = vmor %vm658, %vm659
  %v661 = vsel %vm660, %v653, %v657
  %v662 = vand.u32 2147483647, %v427
  %vm663 = vcmp.eq.f32.partialorder %v662, 8.507059e+37
  %v664 = vand.u32 %v427, 2147483648
  %v665 = vor.u32 1.1754944e-38, %v664
  %v666 = vsel %vm663, %v665, %v661
  %v667 = vmul.f32 1.0, %v666
  %vm668 = vcmask 7168
  %669 = vst.msk [vmem:[%s7] sm:$0xff] %vm668, %v442
  %670 = vst.msk [vmem:[%s7 + $0x8] sm:$0xff] %vm668, %v457
  %671 = vst.msk [vmem:[%s7 + $0x10] sm:$0xff] %vm668, %v472
  %672 = vst.msk [vmem:[%s7 + $0x18] sm:$0xff] %vm668, %v487
  %673 = vst.msk [vmem:[%s7 + $0x20] sm:$0xff] %vm668, %v502
  %674 = vst.msk [vmem:[%s7 + $0x28] sm:$0xff] %vm668, %v517
  %675 = vst.msk [vmem:[%s7 + $0x30] sm:$0xff] %vm668, %v532
  %676 = vst.msk [vmem:[%s7 + $0x38] sm:$0xff] %vm668, %v547
  %677 = vst.msk [vmem:[%s7 + $0x40] sm:$0xff] %vm668, %v562
  %678 = vst.msk [vmem:[%s7 + $0x48] sm:$0xff] %vm668, %v577
  %679 = vst.msk [vmem:[%s7 + $0x50] sm:$0xff] %vm668, %v592
  %680 = vst.msk [vmem:[%s7 + $0x58] sm:$0xff] %vm668, %v607
  %681 = vst.msk [vmem:[%s7 + $0x60] sm:$0xff] %vm668, %v622
  %682 = vst.msk [vmem:[%s7 + $0x68] sm:$0xff] %vm668, %v637
  %683 = vst.msk [vmem:[%s7 + $0x70] sm:$0xff] %vm668, %v652
  %684 = vst.msk [vmem:[%s7 + $0x78] sm:$0xff] %vm668, %v667
  // Predicated region
  $region30: #{tpu_custom_call.1} parent=0 // pred_check
    _
  $region31: #{tpu_custom_call.1} parent=0 // pred_check_branch
    %686 = sbr.rel (0) target = $region33
  $region32: #{tpu_custom_call.1} parent=0 // pred_region
    _
  $region33: #{tpu_custom_call.1} parent=0 // pred_fallthru
    _
  // Predicated region
  $region34: #{tpu_custom_call.1} parent=0 // pred_check
    _
  $region35: #{tpu_custom_call.1} parent=0 // pred_check_branch
    %688 = sbr.rel (0) target = $region37
  $region36: #{tpu_custom_call.1} parent=0 // pred_region
    _
  $region37: #{tpu_custom_call.1} parent=0 // pred_fallthru
    _

</llo_original>
